<compile_context>
chip_gen: v5e
topology: v5e:2x2
jax: 0.10.0
libtpu: 0.0.40
codegen_flags: <defaults>
</compile_context>

<pallas_src>
import functools
import math

import jax
import jax.numpy as jnp
from jax.experimental import pallas as pl
from jax.experimental.pallas import tpu as pltpu


# ----------------------------- per-chip VMEM limit ---------------------------

def _vmem_limit_bytes():
    """~75% of physical VMEM (48 MiB v7x, 96 MiB v5e/v6e); headroom for DMA."""
    default = 64 * 1024 * 1024
    try:
        cap = getattr(pltpu.get_tpu_info(), "vmem_capacity_bytes", default)
    except Exception:
        cap = default
    return int(cap) * 3 // 4


VMEM_LIMIT = _vmem_limit_bytes()


def _cparams(*dim_sem):
    return pltpu.CompilerParams(dimension_semantics=dim_sem,
                                vmem_limit_bytes=VMEM_LIMIT)


def _round_up(x, m):
    return (x + m - 1) // m * m


# ----------------------------- tiled matmul + bias ----------------------------

def _matmul_bias_kernel(x_ref, w_ref, b_ref, o_ref, acc_ref):
    @pl.when(pl.program_id(2) == 0)
    def _():
        acc_ref[...] = jnp.zeros_like(acc_ref)

    acc_ref[...] += jnp.dot(x_ref[...], w_ref[...],
                            preferred_element_type=jnp.float32)

    @pl.when(pl.program_id(2) == pl.num_programs(2) - 1)
    def _():
        o_ref[...] = acc_ref[...] + b_ref[...]


def matmul_bias(x, w, b, *, tm=256, tn=256, tk=512):
    """x:[M,K] @ w:[K,N] + b:[N] -> [M,N] f32.  bf16 MXU operands, f32 acc.

    Tiled grid: M/N parallel (megacore-shardable on v7x), K is the reduction
    axis with a VMEM accumulator, so DMA pipelines against the MXU.
    """
    M, K = x.shape
    N = w.shape[1]
    tm = tm if M >= tm else _round_up(M, 8)
    tn = tn if N >= tn else _round_up(N, 128)
    tk = tk if K >= tk else _round_up(K, 128)
    Mp, Kp, Np = _round_up(M, tm), _round_up(K, tk), _round_up(N, tn)

    xb = jnp.pad(x.astype(jnp.bfloat16), ((0, Mp - M), (0, Kp - K)))
    wb = jnp.pad(w.astype(jnp.bfloat16), ((0, Kp - K), (0, Np - N)))
    bb = jnp.pad(b.astype(jnp.float32), (0, Np - N)).reshape(1, Np)

    out = pl.pallas_call(
        _matmul_bias_kernel,
        out_shape=jax.ShapeDtypeStruct((Mp, Np), jnp.float32),
        grid=(Mp // tm, Np // tn, Kp // tk),
        in_specs=[pl.BlockSpec((tm, tk), lambda i, j, k: (i, k)),
                  pl.BlockSpec((tk, tn), lambda i, j, k: (k, j)),
                  pl.BlockSpec((1, tn), lambda i, j, k: (0, j))],
        out_specs=pl.BlockSpec((tm, tn), lambda i, j, k: (i, j)),
        scratch_shapes=[pltpu.VMEM((tm, tn), jnp.float32)],
        compiler_params=_cparams("parallel", "parallel", "arbitrary"),
    )(xb, wb, bb)
    return out[:M, :N]


# ----------------------- fused LayerNorm -> matmul + bias ---------------------

def _ln_matmul_bias_kernel(x_ref, g_ref, be_ref, w_ref, b_ref, o_ref, *, eps):
    x = x_ref[...]                                   # f32 (tm, C)
    mean = jnp.mean(x, axis=-1, keepdims=True)
    cen = x - mean
    var = jnp.mean(cen * cen, axis=-1, keepdims=True)
    y = cen * jax.lax.rsqrt(var + eps) * g_ref[...] + be_ref[...]
    o_ref[...] = jnp.dot(y.astype(jnp.bfloat16), w_ref[...],
                         preferred_element_type=jnp.float32) + b_ref[...]


def layernorm_matmul_bias(x, gamma, beta, w, b, *, eps=1e-6, tm=256, tn=256):
    """LayerNorm(x) @ w + b in one kernel; x:[M,C] with C kept un-tiled."""
    M, C = x.shape
    N = w.shape[1]
    tm = tm if M >= tm else _round_up(M, 8)
    tn = tn if N >= tn else _round_up(N, 128)
    Mp, Np = _round_up(M, tm), _round_up(N, tn)

    xp = jnp.pad(x.astype(jnp.float32), ((0, Mp - M), (0, 0)))
    wb = jnp.pad(w.astype(jnp.bfloat16), ((0, 0), (0, Np - N)))
    bb = jnp.pad(b.astype(jnp.float32), (0, Np - N)).reshape(1, Np)

    out = pl.pallas_call(
        functools.partial(_ln_matmul_bias_kernel, eps=eps),
        out_shape=jax.ShapeDtypeStruct((Mp, Np), jnp.float32),
        grid=(Mp // tm, Np // tn),
        in_specs=[pl.BlockSpec((tm, C), lambda i, j: (i, 0)),
                  pl.BlockSpec((1, C), lambda i, j: (0, 0)),
                  pl.BlockSpec((1, C), lambda i, j: (0, 0)),
                  pl.BlockSpec((C, tn), lambda i, j: (0, j)),
                  pl.BlockSpec((1, tn), lambda i, j: (0, j))],
        out_specs=pl.BlockSpec((tm, tn), lambda i, j: (i, j)),
        compiler_params=_cparams("parallel", "parallel"),
    )(xp, gamma.reshape(1, C), beta.reshape(1, C), wb, bb)
    return out[:M, :N]


# ----------------------------- head-batched attention -------------------------

def _attention_kernel(q_ref, k_ref, v_ref, o_ref, *, scale, num_heads, head_dim):
    q = q_ref[0]                                     # (N, C)  bf16
    k = k_ref[0]                                     # (Nk, C) bf16
    v = v_ref[0]                                     # (Nk, C) bf16
    outs = []
    for h in range(num_heads):                       # static unroll over heads
        sl = slice(h * head_dim, (h + 1) * head_dim)
        qh, kh, vh = q[:, sl], k[:, sl], v[:, sl]
        s = jax.lax.dot_general(qh, kh, (((1,), (1,)), ((), ())),
                                preferred_element_type=jnp.float32) * scale
        s = s - jnp.max(s, axis=-1, keepdims=True)   # softmax in f32
        p = jnp.exp(s)
        inv = pl.reciprocal(jnp.sum(p, axis=-1, keepdims=True), approx=True)
        p = (p * inv).astype(jnp.bfloat16)
        outs.append(jnp.dot(p, vh, preferred_element_type=jnp.float32))
    # Lane-dense (N, C) store; head order matches PyTorch permute(0,2,1,3).view.
    o_ref[0] = jnp.concatenate(outs, axis=-1)


def attention(q, k, v, *, num_heads, scale):
    """q:[B,N,C], k/v:[B,Nk,C] -> [B,N,C]; all heads per batch in one step."""
    B, N, C = q.shape
    Nk = k.shape[1]
    d = C // num_heads
    # TODO(synk): at very large N this should tile query/key flash-style; full
    # sequence blocks are fine at SegFormer stage token counts.
    return pl.pallas_call(
        functools.partial(_attention_kernel, scale=scale,
                          num_heads=num_heads, head_dim=d),
        out_shape=jax.ShapeDtypeStruct((B, N, C), jnp.float32),
        grid=(B,),
        in_specs=[pl.BlockSpec((1, N, C), lambda i: (i, 0, 0)),
                  pl.BlockSpec((1, Nk, C), lambda i: (i, 0, 0)),
                  pl.BlockSpec((1, Nk, C), lambda i: (i, 0, 0))],
        out_specs=pl.BlockSpec((1, N, C), lambda i: (i, 0, 0)),
        compiler_params=_cparams("parallel"),
    )(q.astype(jnp.bfloat16), k.astype(jnp.bfloat16), v.astype(jnp.bfloat16))


# ----------------------------- plain-JAX glue ---------------------------------

def extract_patches(x_nhwc, k, stride):
    """Non-overlapping im2col for the SR conv (kernel == stride, no padding).

    Token/byte count is exactly the input size (no blowup), so the HBM round
    trip is cheap; ordering is (kh, kw, C) to match the weight layout below.
    """
    B, H, W, C = x_nhwc.shape
    Ho = (H - k) // stride + 1
    Wo = (W - k) // stride + 1
    cols = []
    for i in range(k):
        for j in range(k):
            cols.append(x_nhwc[:, i:i + Ho * stride:stride,
                               j:j + Wo * stride:stride, :])
    patches = jnp.stack(cols, axis=3)                # [B, Ho, Wo, k*k, C]
    return patches.reshape(B, Ho, Wo, k * k * C), Ho, Wo


# ----------------------------- SegAttention forward ---------------------------

def seg_attention_forward(x, H, W, params, *, num_heads, sr_ratio):
    """x: [B, N, C] with N = H*W.  Returns [B, N, C].

    Equivalent to: EfficientAttention(x, H, W) -> Linear(C, C).
    Dropout / attn-drop are identity (inference).  # TODO(synk): dropout omitted.
    """
    B, N, C = x.shape
    d = C // num_heads
    x2 = x.reshape(B * N, C)

    if sr_ratio > 1:
        # Q from full-resolution tokens.
        q = matmul_bias(x2, params['q_w'], params['q_b'])
        # Spatial-reduction conv (kernel=stride=sr) as im2col + matmul,
        # then LayerNorm fused into the combined K/V projection.
        xs = x.reshape(B, H, W, C)
        patches, Hs, Ws = extract_patches(xs, sr_ratio, sr_ratio)
        Nk = Hs * Ws
        kv_in = matmul_bias(patches.reshape(B * Nk, sr_ratio * sr_ratio * C),
                            params['sr_w'], params['sr_b'])
        kv = layernorm_matmul_bias(kv_in, params['ln_w'], params['ln_b'],
                                   params['kv_w'], params['kv_b'])
    else:
        # Fused Q/K/V projection: one read of x, one (C, 3C) matmul.
        qkv = matmul_bias(x2, params['qkv_w'], params['qkv_b'])
        q = qkv[:, :C]
        kv = qkv[:, C:]
        Nk = N

    k = kv[:, :C].reshape(B, Nk, C)
    v = kv[:, C:].reshape(B, Nk, C)
    q = q.reshape(B, N, C)

    o = attention(q, k, v, num_heads=num_heads, scale=d ** (-0.5))
    out = matmul_bias(o.reshape(B * N, C), params['out_w'], params['out_b'])
    return out.reshape(B, N, C)


# ----------------------------- deterministic params ---------------------------

def make_params(key, dim, num_heads, sr_ratio):
    del num_heads  # only used at call time
    ks = jax.random.split(key, 5)

    def trunc(k, shape):
        return 0.02 * jax.random.truncated_normal(k, -2.0, 2.0, shape, jnp.float32)

    def zeros(*s):
        return jnp.zeros(s, jnp.float32)

    q_w = trunc(ks[0], (dim, dim))
    k_w = trunc(ks[1], (dim, dim))
    v_w = trunc(ks[2], (dim, dim))
    out_w = trunc(ks[3], (dim, dim))

    p = dict(out_w=out_w, out_b=zeros(dim))
    if sr_ratio > 1:
        fan_out = sr_ratio * sr_ratio * dim
        # Conv2d weight laid out as (kh, kw, C_in, C_out) flattened -> matmul.
        sr_w = math.sqrt(2.0 / fan_out) * jax.random.normal(
            ks[4], (sr_ratio * sr_ratio * dim, dim), jnp.float32)
        p.update(q_w=q_w, q_b=zeros(dim),
                 kv_w=jnp.concatenate([k_w, v_w], axis=1),   # fused K|V
                 kv_b=zeros(2 * dim),
                 sr_w=sr_w, sr_b=zeros(dim),
                 ln_w=jnp.ones((dim,), jnp.float32), ln_b=zeros(dim))
    else:
        p.update(qkv_w=jnp.concatenate([q_w, k_w, v_w], axis=1),  # fused Q|K|V
                 qkv_b=zeros(3 * dim))
    return p


# ----------------------------- main --------------------------------------------

if __name__ == "__main__":
    root = jax.random.PRNGKey(0)
    kp1, kp2, kx = jax.random.split(root, 3)

    B, H, W, C = 2, 8, 8, 64
    N = H * W
    x = jax.random.normal(kx, (B, N, C), jnp.float32)

    # Config 1: sr_ratio > 1 (SR conv + fused LayerNorm->K/V projection path).
    nh1, sr1 = 2, 2
    params1 = make_params(kp1, C, nh1, sr1)
    fwd1 = jax.jit(lambda xx, pp: seg_attention_forward(
        xx, H, W, pp, num_heads=nh1, sr_ratio=sr1))
    y1 = jax.block_until_ready(fwd1(x, params1))
    assert y1.shape == (B, N, C), y1.shape
    assert bool(jnp.all(jnp.isfinite(y1)))

    # Config 2: sr_ratio == 1 (fused Q/K/V projection path).
    nh2, sr2 = 4, 1
    params2 = make_params(kp2, C, nh2, sr2)
    fwd2 = jax.jit(lambda xx, pp: seg_attention_forward(
        xx, H, W, pp, num_heads=nh2, sr_ratio=sr2))
    y2 = jax.block_until_ready(fwd2(x, params2))
    assert y2.shape == (B, N, C), y2.shape
    assert bool(jnp.all(jnp.isfinite(y2)))

    print("KERNEL_OK")
</pallas_src>

<mosaic_0001>
module attributes {stable_mosaic.version = 11 : i64} {
  func.func @_matmul_bias_kernel(%arg0: i32, %arg1: i32, %arg2: i32, %arg3: memref<32x256xbf16, #tpu.memory_space<vmem>>, %arg4: memref<256x128xbf16, #tpu.memory_space<vmem>>, %arg5: memref<1x128xf32, #tpu.memory_space<vmem>>, %arg6: memref<32x128xf32, #tpu.memory_space<vmem>>, %arg7: memref<32x128xf32, #tpu.memory_space<vmem>>) attributes {dimension_semantics = [#tpu.dimension_semantics<parallel>, #tpu.dimension_semantics<parallel>, #tpu.dimension_semantics<arbitrary>], iteration_bounds = array<i64: 1, 1, 1>, scalar_prefetch = 0 : i64, scratch_operands = 1 : i64, tpu.core_type = #tpu.core_type<tc>, window_params = [{transform_indices = @transform_0, window_bounds = array<i64: 32, 256>}, {transform_indices = @transform_1, window_bounds = array<i64: 256, 128>}, {transform_indices = @transform_2, window_bounds = array<i64: 1, 128>}, {transform_indices = @transform_3, window_bounds = array<i64: 32, 128>}]} {
    %c0_i32 = arith.constant 0 : i32
    %0 = arith.cmpi eq, %arg2, %c0_i32 : i32
    %1 = arith.extui %0 : i1 to i32
    %c0_i32_0 = arith.constant 0 : i32
    %2 = arith.cmpi ne, %1, %c0_i32_0 : i32
    scf.if %2 {
      %cst_10 = arith.constant 0.000000e+00 : f32
      %12 = vector.broadcast %cst_10 : f32 to vector<32x128xf32>
      %c0_11 = arith.constant 0 : index
      %c0_12 = arith.constant 0 : index
      %13 = vector.load %arg7[%c0_11, %c0_12] : memref<32x128xf32, #tpu.memory_space<vmem>>, vector<32x128xf32>
      tpu.vector_store %arg7[%c0_11, %c0_12], %12 {strides = array<i32>} : memref<32x128xf32, #tpu.memory_space<vmem>>, vector<32x128xf32>,
    } else {
    }
    %c0 = arith.constant 0 : index
    %c0_1 = arith.constant 0 : index
    %3 = vector.load %arg7[%c0, %c0_1] : memref<32x128xf32, #tpu.memory_space<vmem>>, vector<32x128xf32>
    %c0_2 = arith.constant 0 : index
    %c0_3 = arith.constant 0 : index
    %4 = vector.load %arg3[%c0_2, %c0_3] : memref<32x256xbf16, #tpu.memory_space<vmem>>, vector<32x256xbf16>
    %c0_4 = arith.constant 0 : index
    %c0_5 = arith.constant 0 : index
    %5 = vector.load %arg4[%c0_4, %c0_5] : memref<256x128xbf16, #tpu.memory_space<vmem>>, vector<256x128xbf16>
    %cst = arith.constant dense<0.000000e+00> : vector<32x128xf32>
    %6 = tpu.matmul %4, %5, %cst {dimension_numbers = #tpu.dot_dimension_numbers<[1], [0], [0], [1], [0, 0, 1, 1], [], []>} : vector<32x256xbf16>, vector<256x128xbf16>, vector<32x128xf32> -> vector<32x128xf32>
    %7 = arith.addf %3, %6 : vector<32x128xf32>
    %c0_6 = arith.constant 0 : index
    %c0_7 = arith.constant 0 : index
    %8 = vector.load %arg7[%c0_6, %c0_7] : memref<32x128xf32, #tpu.memory_space<vmem>>, vector<32x128xf32>
    tpu.vector_store %arg7[%c0_6, %c0_7], %7 {strides = array<i32>} : memref<32x128xf32, #tpu.memory_space<vmem>>, vector<32x128xf32>,
    %c0_i32_8 = arith.constant 0 : i32
    %9 = arith.cmpi eq, %arg2, %c0_i32_8 : i32
    %10 = arith.extui %9 : i1 to i32
    %c0_i32_9 = arith.constant 0 : i32
    %11 = arith.cmpi ne, %10, %c0_i32_9 : i32
    scf.if %11 {
      %c0_10 = arith.constant 0 : index
      %c0_11 = arith.constant 0 : index
      %12 = vector.load %arg7[%c0_10, %c0_11] : memref<32x128xf32, #tpu.memory_space<vmem>>, vector<32x128xf32>
      %c0_12 = arith.constant 0 : index
      %c0_13 = arith.constant 0 : index
      %13 = vector.load %arg5[%c0_12, %c0_13] : memref<1x128xf32, #tpu.memory_space<vmem>>, vector<1x128xf32>
      %14 = vector.broadcast %13 : vector<1x128xf32> to vector<32x128xf32>
      %15 = arith.addf %12, %14 : vector<32x128xf32>
      %c0_14 = arith.constant 0 : index
      %c0_15 = arith.constant 0 : index
      %16 = vector.load %arg6[%c0_14, %c0_15] : memref<32x128xf32, #tpu.memory_space<vmem>>, vector<32x128xf32>
      tpu.vector_store %arg6[%c0_14, %c0_15], %15 {strides = array<i32>} : memref<32x128xf32, #tpu.memory_space<vmem>>, vector<32x128xf32>,
    } else {
    }
    return
  }
  func.func @transform_0(%arg0: i32, %arg1: i32, %arg2: i32) -> (i32, i32) {
    %c0_i32 = arith.constant 0 : i32
    return %arg0, %arg2 : i32, i32
  }
  func.func @transform_1(%arg0: i32, %arg1: i32, %arg2: i32) -> (i32, i32) {
    %c0_i32 = arith.constant 0 : i32
    return %arg2, %arg1 : i32, i32
  }
  func.func @transform_2(%arg0: i32, %arg1: i32, %arg2: i32) -> (i32, i32) {
    %c0_i32 = arith.constant 0 : i32
    %c0_i32_0 = arith.constant 0 : i32
    return %c0_i32, %arg1 : i32, i32
  }
  func.func @transform_3(%arg0: i32, %arg1: i32, %arg2: i32) -> (i32, i32) {
    %c0_i32 = arith.constant 0 : i32
    return %arg0, %arg1 : i32, i32
  }
}

module attributes {stable_mosaic.version = 11 : i64} {
  func.func @_ln_matmul_bias_kernel(%arg0: i32, %arg1: i32, %arg2: memref<32x64xf32, #tpu.memory_space<vmem>>, %arg3: memref<1x64xf32, #tpu.memory_space<vmem>>, %arg4: memref<1x64xf32, #tpu.memory_space<vmem>>, %arg5: memref<64x128xbf16, #tpu.memory_space<vmem>>, %arg6: memref<1x128xf32, #tpu.memory_space<vmem>>, %arg7: memref<32x128xf32, #tpu.memory_space<vmem>>) attributes {dimension_semantics = [#tpu.dimension_semantics<parallel>, #tpu.dimension_semantics<parallel>], iteration_bounds = array<i64: 1, 1>, scalar_prefetch = 0 : i64, scratch_operands = 0 : i64, tpu.core_type = #tpu.core_type<tc>, window_params = [{transform_indices = @transform_0, window_bounds = array<i64: 32, 64>}, {pipeline_mode = #tpu.pipeline_mode<synchronous>, transform_indices = @transform_1, window_bounds = array<i64: 1, 64>}, {pipeline_mode = #tpu.pipeline_mode<synchronous>, transform_indices = @transform_2, window_bounds = array<i64: 1, 64>}, {transform_indices = @transform_3, window_bounds = array<i64: 64, 128>}, {transform_indices = @transform_4, window_bounds = array<i64: 1, 128>}, {transform_indices = @transform_5, window_bounds = array<i64: 32, 128>}]} {
    %c0 = arith.constant 0 : index
    %c0_0 = arith.constant 0 : index
    %0 = vector.load %arg2[%c0, %c0_0] : memref<32x64xf32, #tpu.memory_space<vmem>>, vector<32x64xf32>
    %cst = arith.constant dense<0.000000e+00> : vector<32xf32>
    %1 = vector.multi_reduction <add>, %0, %cst [1] : vector<32x64xf32> to vector<32xf32>
    %2 = vector.shape_cast %1 : vector<32xf32> to vector<32x1xf32>
    %cst_1 = arith.constant 6.400000e+01 : f32
    %3 = vector.broadcast %cst_1 : f32 to vector<32x1xf32>
    %4 = arith.divf %2, %3 : vector<32x1xf32>
    %5 = vector.broadcast %4 : vector<32x1xf32> to vector<32x64xf32>
    %6 = arith.subf %0, %5 : vector<32x64xf32>
    %7 = arith.mulf %6, %6 : vector<32x64xf32>
    %cst_2 = arith.constant dense<0.000000e+00> : vector<32xf32>
    %8 = vector.multi_reduction <add>, %7, %cst_2 [1] : vector<32x64xf32> to vector<32xf32>
    %9 = vector.shape_cast %8 : vector<32xf32> to vector<32x1xf32>
    %cst_3 = arith.constant 6.400000e+01 : f32
    %10 = vector.broadcast %cst_3 : f32 to vector<32x1xf32>
    %11 = arith.divf %9, %10 : vector<32x1xf32>
    %cst_4 = arith.constant 9.99999997E-7 : f32
    %12 = vector.broadcast %cst_4 : f32 to vector<32x1xf32>
    %13 = arith.addf %11, %12 : vector<32x1xf32>
    %14 = math.rsqrt %13 : vector<32x1xf32>
    %15 = vector.broadcast %14 : vector<32x1xf32> to vector<32x64xf32>
    %16 = arith.mulf %6, %15 : vector<32x64xf32>
    %c0_5 = arith.constant 0 : index
    %c0_6 = arith.constant 0 : index
    %17 = vector.load %arg3[%c0_5, %c0_6] : memref<1x64xf32, #tpu.memory_space<vmem>>, vector<1x64xf32>
    %18 = vector.broadcast %17 : vector<1x64xf32> to vector<32x64xf32>
    %19 = arith.mulf %16, %18 : vector<32x64xf32>
    %c0_7 = arith.constant 0 : index
    %c0_8 = arith.constant 0 : index
    %20 = vector.load %arg4[%c0_7, %c0_8] : memref<1x64xf32, #tpu.memory_space<vmem>>, vector<1x64xf32>
    %21 = vector.broadcast %20 : vector<1x64xf32> to vector<32x64xf32>
    %22 = arith.addf %19, %21 : vector<32x64xf32>
    %23 = arith.truncf %22 : vector<32x64xf32> to vector<32x64xbf16>
    %c0_9 = arith.constant 0 : index
    %c0_10 = arith.constant 0 : index
    %24 = vector.load %arg5[%c0_9, %c0_10] : memref<64x128xbf16, #tpu.memory_space<vmem>>, vector<64x128xbf16>
    %cst_11 = arith.constant dense<0.000000e+00> : vector<32x128xf32>
    %25 = tpu.matmul %23, %24, %cst_11 {dimension_numbers = #tpu.dot_dimension_numbers<[1], [0], [0], [1], [0, 0, 1, 1], [], []>} : vector<32x64xbf16>, vector<64x128xbf16>, vector<32x128xf32> -> vector<32x128xf32>
    %c0_12 = arith.constant 0 : index
    %c0_13 = arith.constant 0 : index
    %26 = vector.load %arg6[%c0_12, %c0_13] : memref<1x128xf32, #tpu.memory_space<vmem>>, vector<1x128xf32>
    %27 = vector.broadcast %26 : vector<1x128xf32> to vector<32x128xf32>
    %28 = arith.addf %25, %27 : vector<32x128xf32>
    %c0_14 = arith.constant 0 : index
    %c0_15 = arith.constant 0 : index
    %29 = vector.load %arg7[%c0_14, %c0_15] : memref<32x128xf32, #tpu.memory_space<vmem>>, vector<32x128xf32>
    tpu.vector_store %arg7[%c0_14, %c0_15], %28 {strides = array<i32>} : memref<32x128xf32, #tpu.memory_space<vmem>>, vector<32x128xf32>,
    return
  }
  func.func @transform_0(%arg0: i32, %arg1: i32) -> (i32, i32) {
    %c0_i32 = arith.constant 0 : i32
    %c0_i32_0 = arith.constant 0 : i32
    return %arg0, %c0_i32 : i32, i32
  }
  func.func @transform_1(%arg0: i32, %arg1: i32) -> (i32, i32) {
    %c0_i32 = arith.constant 0 : i32
    %c0_i32_0 = arith.constant 0 : i32
    %c0_i32_1 = arith.constant 0 : i32
    return %c0_i32, %c0_i32_0 : i32, i32
  }
  func.func @transform_2(%arg0: i32, %arg1: i32) -> (i32, i32) {
    %c0_i32 = arith.constant 0 : i32
    %c0_i32_0 = arith.constant 0 : i32
    %c0_i32_1 = arith.constant 0 : i32
    return %c0_i32, %c0_i32_0 : i32, i32
  }
  func.func @transform_3(%arg0: i32, %arg1: i32) -> (i32, i32) {
    %c0_i32 = arith.constant 0 : i32
    %c0_i32_0 = arith.constant 0 : i32
    return %c0_i32, %arg1 : i32, i32
  }
  func.func @transform_4(%arg0: i32, %arg1: i32) -> (i32, i32) {
    %c0_i32 = arith.constant 0 : i32
    %c0_i32_0 = arith.constant 0 : i32
    return %c0_i32, %arg1 : i32, i32
  }
  func.func @transform_5(%arg0: i32, %arg1: i32) -> (i32, i32) {
    %c0_i32 = arith.constant 0 : i32
    return %arg0, %arg1 : i32, i32
  }
}

module attributes {stable_mosaic.version = 11 : i64} {
  func.func @_matmul_bias_kernel(%arg0: i32, %arg1: i32, %arg2: i32, %arg3: memref<128x128xbf16, #tpu.memory_space<vmem>>, %arg4: memref<128x128xbf16, #tpu.memory_space<vmem>>, %arg5: memref<1x128xf32, #tpu.memory_space<vmem>>, %arg6: memref<128x128xf32, #tpu.memory_space<vmem>>, %arg7: memref<128x128xf32, #tpu.memory_space<vmem>>) attributes {dimension_semantics = [#tpu.dimension_semantics<parallel>, #tpu.dimension_semantics<parallel>, #tpu.dimension_semantics<arbitrary>], iteration_bounds = array<i64: 1, 1, 1>, scalar_prefetch = 0 : i64, scratch_operands = 1 : i64, tpu.core_type = #tpu.core_type<tc>, window_params = [{transform_indices = @transform_0, window_bounds = array<i64: 128, 128>}, {transform_indices = @transform_1, window_bounds = array<i64: 128, 128>}, {transform_indices = @transform_2, window_bounds = array<i64: 1, 128>}, {transform_indices = @transform_3, window_bounds = array<i64: 128, 128>}]} {
    %c0_i32 = arith.constant 0 : i32
    %0 = arith.cmpi eq, %arg2, %c0_i32 : i32
    %1 = arith.extui %0 : i1 to i32
    %c0_i32_0 = arith.constant 0 : i32
    %2 = arith.cmpi ne, %1, %c0_i32_0 : i32
    scf.if %2 {
      %cst_10 = arith.constant 0.000000e+00 : f32
      %12 = vector.broadcast %cst_10 : f32 to vector<128x128xf32>
      %c0_11 = arith.constant 0 : index
      %c0_12 = arith.constant 0 : index
      %13 = vector.load %arg7[%c0_11, %c0_12] : memref<128x128xf32, #tpu.memory_space<vmem>>, vector<128x128xf32>
      tpu.vector_store %arg7[%c0_11, %c0_12], %12 {strides = array<i32>} : memref<128x128xf32, #tpu.memory_space<vmem>>, vector<128x128xf32>,
    } else {
    }
    %c0 = arith.constant 0 : index
    %c0_1 = arith.constant 0 : index
    %3 = vector.load %arg7[%c0, %c0_1] : memref<128x128xf32, #tpu.memory_space<vmem>>, vector<128x128xf32>
    %c0_2 = arith.constant 0 : index
    %c0_3 = arith.constant 0 : index
    %4 = vector.load %arg3[%c0_2, %c0_3] : memref<128x128xbf16, #tpu.memory_space<vmem>>, vector<128x128xbf16>
    %c0_4 = arith.constant 0 : index
    %c0_5 = arith.constant 0 : index
    %5 = vector.load %arg4[%c0_4, %c0_5] : memref<128x128xbf16, #tpu.memory_space<vmem>>, vector<128x128xbf16>
    %cst = arith.constant dense<0.000000e+00> : vector<128x128xf32>
    %6 = tpu.matmul %4, %5, %cst {dimension_numbers = #tpu.dot_dimension_numbers<[1], [0], [0], [1], [0, 0, 1, 1], [], []>} : vector<128x128xbf16>, vector<128x128xbf16>, vector<128x128xf32> -> vector<128x128xf32>
    %7 = arith.addf %3, %6 : vector<128x128xf32>
    %c0_6 = arith.constant 0 : index
    %c0_7 = arith.constant 0 : index
    %8 = vector.load %arg7[%c0_6, %c0_7] : memref<128x128xf32, #tpu.memory_space<vmem>>, vector<128x128xf32>
    tpu.vector_store %arg7[%c0_6, %c0_7], %7 {strides = array<i32>} : memref<128x128xf32, #tpu.memory_space<vmem>>, vector<128x128xf32>,
    %c0_i32_8 = arith.constant 0 : i32
    %9 = arith.cmpi eq, %arg2, %c0_i32_8 : i32
    %10 = arith.extui %9 : i1 to i32
    %c0_i32_9 = arith.constant 0 : i32
    %11 = arith.cmpi ne, %10, %c0_i32_9 : i32
    scf.if %11 {
      %c0_10 = arith.constant 0 : index
      %c0_11 = arith.constant 0 : index
      %12 = vector.load %arg7[%c0_10, %c0_11] : memref<128x128xf32, #tpu.memory_space<vmem>>, vector<128x128xf32>
      %c0_12 = arith.constant 0 : index
      %c0_13 = arith.constant 0 : index
      %13 = vector.load %arg5[%c0_12, %c0_13] : memref<1x128xf32, #tpu.memory_space<vmem>>, vector<1x128xf32>
      %14 = vector.broadcast %13 : vector<1x128xf32> to vector<128x128xf32>
      %15 = arith.addf %12, %14 : vector<128x128xf32>
      %c0_14 = arith.constant 0 : index
      %c0_15 = arith.constant 0 : index
      %16 = vector.load %arg6[%c0_14, %c0_15] : memref<128x128xf32, #tpu.memory_space<vmem>>, vector<128x128xf32>
      tpu.vector_store %arg6[%c0_14, %c0_15], %15 {strides = array<i32>} : memref<128x128xf32, #tpu.memory_space<vmem>>, vector<128x128xf32>,
    } else {
    }
    return
  }
  func.func @transform_0(%arg0: i32, %arg1: i32, %arg2: i32) -> (i32, i32) {
    %c0_i32 = arith.constant 0 : i32
    return %arg0, %arg2 : i32, i32
  }
  func.func @transform_1(%arg0: i32, %arg1: i32, %arg2: i32) -> (i32, i32) {
    %c0_i32 = arith.constant 0 : i32
    return %arg2, %arg1 : i32, i32
  }
  func.func @transform_2(%arg0: i32, %arg1: i32, %arg2: i32) -> (i32, i32) {
    %c0_i32 = arith.constant 0 : i32
    %c0_i32_0 = arith.constant 0 : i32
    return %c0_i32, %arg1 : i32, i32
  }
  func.func @transform_3(%arg0: i32, %arg1: i32, %arg2: i32) -> (i32, i32) {
    %c0_i32 = arith.constant 0 : i32
    return %arg0, %arg1 : i32, i32
  }
}

module attributes {stable_mosaic.version = 11 : i64} {
  func.func @_attention_kernel(%arg0: i32, %arg1: memref<1x64x64xbf16, #tpu.memory_space<vmem>>, %arg2: memref<1x16x64xbf16, #tpu.memory_space<vmem>>, %arg3: memref<1x16x64xbf16, #tpu.memory_space<vmem>>, %arg4: memref<1x64x64xf32, #tpu.memory_space<vmem>>) attributes {dimension_semantics = [#tpu.dimension_semantics<parallel>], iteration_bounds = array<i64: 2>, scalar_prefetch = 0 : i64, scratch_operands = 0 : i64, tpu.core_type = #tpu.core_type<tc>, window_params = [{transform_indices = @transform_0, window_bounds = array<i64: 1, 64, 64>}, {transform_indices = @transform_1, window_bounds = array<i64: 1, 16, 64>}, {transform_indices = @transform_2, window_bounds = array<i64: 1, 16, 64>}, {transform_indices = @transform_3, window_bounds = array<i64: 1, 64, 64>}]} {
    %c0 = arith.constant 0 : index
    %c0_0 = arith.constant 0 : index
    %c0_1 = arith.constant 0 : index
    %0 = vector.load %arg1[%c0, %c0_0, %c0_1] : memref<1x64x64xbf16, #tpu.memory_space<vmem>>, vector<1x64x64xbf16>
    %1 = vector.shape_cast %0 : vector<1x64x64xbf16> to vector<64x64xbf16>
    %c0_2 = arith.constant 0 : index
    %c0_3 = arith.constant 0 : index
    %c0_4 = arith.constant 0 : index
    %2 = vector.load %arg2[%c0_2, %c0_3, %c0_4] : memref<1x16x64xbf16, #tpu.memory_space<vmem>>, vector<1x16x64xbf16>
    %3 = vector.shape_cast %2 : vector<1x16x64xbf16> to vector<16x64xbf16>
    %c0_5 = arith.constant 0 : index
    %c0_6 = arith.constant 0 : index
    %c0_7 = arith.constant 0 : index
    %4 = vector.load %arg3[%c0_5, %c0_6, %c0_7] : memref<1x16x64xbf16, #tpu.memory_space<vmem>>, vector<1x16x64xbf16>
    %5 = vector.shape_cast %4 : vector<1x16x64xbf16> to vector<16x64xbf16>
    %6 = vector.extract_strided_slice %1 {offsets = [0, 0], sizes = [64, 32], strides = [1, 1]} : vector<64x64xbf16> to vector<64x32xbf16>
    %7 = vector.extract_strided_slice %3 {offsets = [0, 0], sizes = [16, 32], strides = [1, 1]} : vector<16x64xbf16> to vector<16x32xbf16>
    %8 = vector.extract_strided_slice %5 {offsets = [0, 0], sizes = [16, 32], strides = [1, 1]} : vector<16x64xbf16> to vector<16x32xbf16>
    %cst = arith.constant dense<0.000000e+00> : vector<64x16xf32>
    %9 = tpu.matmul %6, %7, %cst {dimension_numbers = #tpu.dot_dimension_numbers<[1], [1], [0], [0], [0, 0, 1, 0], [], []>} : vector<64x32xbf16>, vector<16x32xbf16>, vector<64x16xf32> -> vector<64x16xf32>
    %cst_8 = arith.constant 0.176776692 : f32
    %10 = vector.broadcast %cst_8 : f32 to vector<64x16xf32>
    %11 = arith.mulf %9, %10 : vector<64x16xf32>
    %cst_9 = arith.constant dense<0xFF800000> : vector<64xf32>
    %12 = vector.multi_reduction <maximumf>, %11, %cst_9 [1] : vector<64x16xf32> to vector<64xf32>
    %13 = vector.shape_cast %12 : vector<64xf32> to vector<64x1xf32>
    %14 = vector.broadcast %13 : vector<64x1xf32> to vector<64x16xf32>
    %15 = arith.subf %11, %14 : vector<64x16xf32>
    %16 = math.exp %15 : vector<64x16xf32>
    %cst_10 = arith.constant dense<0.000000e+00> : vector<64xf32>
    %17 = vector.multi_reduction <add>, %16, %cst_10 [1] : vector<64x16xf32> to vector<64xf32>
    %18 = vector.shape_cast %17 : vector<64xf32> to vector<64x1xf32>
    %19 = tpu.reciprocal %18 {approx = true} : vector<64x1xf32> -> vector<64x1xf32>
    %20 = vector.broadcast %19 : vector<64x1xf32> to vector<64x16xf32>
    %21 = arith.mulf %16, %20 : vector<64x16xf32>
    %22 = arith.truncf %21 : vector<64x16xf32> to vector<64x16xbf16>
    %cst_11 = arith.constant dense<0.000000e+00> : vector<64x32xf32>
    %23 = tpu.matmul %22, %8, %cst_11 {dimension_numbers = #tpu.dot_dimension_numbers<[1], [0], [0], [1], [0, 0, 1, 1], [], []>} : vector<64x16xbf16>, vector<16x32xbf16>, vector<64x32xf32> -> vector<64x32xf32>
    %24 = vector.extract_strided_slice %1 {offsets = [0, 32], sizes = [64, 32], strides = [1, 1]} : vector<64x64xbf16> to vector<64x32xbf16>
    %25 = vector.extract_strided_slice %3 {offsets = [0, 32], sizes = [16, 32], strides = [1, 1]} : vector<16x64xbf16> to vector<16x32xbf16>
    %26 = vector.extract_strided_slice %5 {offsets = [0, 32], sizes = [16, 32], strides = [1, 1]} : vector<16x64xbf16> to vector<16x32xbf16>
    %cst_12 = arith.constant dense<0.000000e+00> : vector<64x16xf32>
    %27 = tpu.matmul %24, %25, %cst_12 {dimension_numbers = #tpu.dot_dimension_numbers<[1], [1], [0], [0], [0, 0, 1, 0], [], []>} : vector<64x32xbf16>, vector<16x32xbf16>, vector<64x16xf32> -> vector<64x16xf32>
    %cst_13 = arith.constant 0.176776692 : f32
    %28 = vector.broadcast %cst_13 : f32 to vector<64x16xf32>
    %29 = arith.mulf %27, %28 : vector<64x16xf32>
    %cst_14 = arith.constant dense<0xFF800000> : vector<64xf32>
    %30 = vector.multi_reduction <maximumf>, %29, %cst_14 [1] : vector<64x16xf32> to vector<64xf32>
    %31 = vector.shape_cast %30 : vector<64xf32> to vector<64x1xf32>
    %32 = vector.broadcast %31 : vector<64x1xf32> to vector<64x16xf32>
    %33 = arith.subf %29, %32 : vector<64x16xf32>
    %34 = math.exp %33 : vector<64x16xf32>
    %cst_15 = arith.constant dense<0.000000e+00> : vector<64xf32>
    %35 = vector.multi_reduction <add>, %34, %cst_15 [1] : vector<64x16xf32> to vector<64xf32>
    %36 = vector.shape_cast %35 : vector<64xf32> to vector<64x1xf32>
    %37 = tpu.reciprocal %36 {approx = true} : vector<64x1xf32> -> vector<64x1xf32>
    %38 = vector.broadcast %37 : vector<64x1xf32> to vector<64x16xf32>
    %39 = arith.mulf %34, %38 : vector<64x16xf32>
    %40 = arith.truncf %39 : vector<64x16xf32> to vector<64x16xbf16>
    %cst_16 = arith.constant dense<0.000000e+00> : vector<64x32xf32>
    %41 = tpu.matmul %40, %26, %cst_16 {dimension_numbers = #tpu.dot_dimension_numbers<[1], [0], [0], [1], [0, 0, 1, 1], [], []>} : vector<64x16xbf16>, vector<16x32xbf16>, vector<64x32xf32> -> vector<64x32xf32>
    %42 = tpu.concatenate %23, %41 in 1 : vector<64x32xf32>, vector<64x32xf32> -> vector<64x64xf32>
    %c0_17 = arith.constant 0 : index
    %c0_18 = arith.constant 0 : index
    %c0_19 = arith.constant 0 : index
    %43 = vector.load %arg4[%c0_17, %c0_18, %c0_19] : memref<1x64x64xf32, #tpu.memory_space<vmem>>, vector<1x64x64xf32>
    %44 = vector.shape_cast %43 : vector<1x64x64xf32> to vector<64x64xf32>
    %45 = vector.shape_cast %42 : vector<64x64xf32> to vector<1x64x64xf32>
    tpu.vector_store %arg4[%c0_17, %c0_18, %c0_19], %45 {strides = array<i32>} : memref<1x64x64xf32, #tpu.memory_space<vmem>>, vector<1x64x64xf32>,
    return
  }
  func.func @transform_0(%arg0: i32) -> (i32, i32, i32) {
    %c0_i32 = arith.constant 0 : i32
    %c0_i32_0 = arith.constant 0 : i32
    %c0_i32_1 = arith.constant 0 : i32
    return %arg0, %c0_i32, %c0_i32_0 : i32, i32, i32
  }
  func.func @transform_1(%arg0: i32) -> (i32, i32, i32) {
    %c0_i32 = arith.constant 0 : i32
    %c0_i32_0 = arith.constant 0 : i32
    %c0_i32_1 = arith.constant 0 : i32
    return %arg0, %c0_i32, %c0_i32_0 : i32, i32, i32
  }
  func.func @transform_2(%arg0: i32) -> (i32, i32, i32) {
    %c0_i32 = arith.constant 0 : i32
    %c0_i32_0 = arith.constant 0 : i32
    %c0_i32_1 = arith.constant 0 : i32
    return %arg0, %c0_i32, %c0_i32_0 : i32, i32, i32
  }
  func.func @transform_3(%arg0: i32) -> (i32, i32, i32) {
    %c0_i32 = arith.constant 0 : i32
    %c0_i32_0 = arith.constant 0 : i32
    %c0_i32_1 = arith.constant 0 : i32
    return %arg0, %c0_i32, %c0_i32_0 : i32, i32, i32
  }
}

module attributes {stable_mosaic.version = 11 : i64} {
  func.func @_matmul_bias_kernel(%arg0: i32, %arg1: i32, %arg2: i32, %arg3: memref<128x128xbf16, #tpu.memory_space<vmem>>, %arg4: memref<128x128xbf16, #tpu.memory_space<vmem>>, %arg5: memref<1x128xf32, #tpu.memory_space<vmem>>, %arg6: memref<128x128xf32, #tpu.memory_space<vmem>>, %arg7: memref<128x128xf32, #tpu.memory_space<vmem>>) attributes {dimension_semantics = [#tpu.dimension_semantics<parallel>, #tpu.dimension_semantics<parallel>, #tpu.dimension_semantics<arbitrary>], iteration_bounds = array<i64: 1, 1, 1>, scalar_prefetch = 0 : i64, scratch_operands = 1 : i64, tpu.core_type = #tpu.core_type<tc>, window_params = [{transform_indices = @transform_0, window_bounds = array<i64: 128, 128>}, {transform_indices = @transform_1, window_bounds = array<i64: 128, 128>}, {transform_indices = @transform_2, window_bounds = array<i64: 1, 128>}, {transform_indices = @transform_3, window_bounds = array<i64: 128, 128>}]} {
    %c0_i32 = arith.constant 0 : i32
    %0 = arith.cmpi eq, %arg2, %c0_i32 : i32
    %1 = arith.extui %0 : i1 to i32
    %c0_i32_0 = arith.constant 0 : i32
    %2 = arith.cmpi ne, %1, %c0_i32_0 : i32
    scf.if %2 {
      %cst_10 = arith.constant 0.000000e+00 : f32
      %12 = vector.broadcast %cst_10 : f32 to vector<128x128xf32>
      %c0_11 = arith.constant 0 : index
      %c0_12 = arith.constant 0 : index
      %13 = vector.load %arg7[%c0_11, %c0_12] : memref<128x128xf32, #tpu.memory_space<vmem>>, vector<128x128xf32>
      tpu.vector_store %arg7[%c0_11, %c0_12], %12 {strides = array<i32>} : memref<128x128xf32, #tpu.memory_space<vmem>>, vector<128x128xf32>,
    } else {
    }
    %c0 = arith.constant 0 : index
    %c0_1 = arith.constant 0 : index
    %3 = vector.load %arg7[%c0, %c0_1] : memref<128x128xf32, #tpu.memory_space<vmem>>, vector<128x128xf32>
    %c0_2 = arith.constant 0 : index
    %c0_3 = arith.constant 0 : index
    %4 = vector.load %arg3[%c0_2, %c0_3] : memref<128x128xbf16, #tpu.memory_space<vmem>>, vector<128x128xbf16>
    %c0_4 = arith.constant 0 : index
    %c0_5 = arith.constant 0 : index
    %5 = vector.load %arg4[%c0_4, %c0_5] : memref<128x128xbf16, #tpu.memory_space<vmem>>, vector<128x128xbf16>
    %cst = arith.constant dense<0.000000e+00> : vector<128x128xf32>
    %6 = tpu.matmul %4, %5, %cst {dimension_numbers = #tpu.dot_dimension_numbers<[1], [0], [0], [1], [0, 0, 1, 1], [], []>} : vector<128x128xbf16>, vector<128x128xbf16>, vector<128x128xf32> -> vector<128x128xf32>
    %7 = arith.addf %3, %6 : vector<128x128xf32>
    %c0_6 = arith.constant 0 : index
    %c0_7 = arith.constant 0 : index
    %8 = vector.load %arg7[%c0_6, %c0_7] : memref<128x128xf32, #tpu.memory_space<vmem>>, vector<128x128xf32>
    tpu.vector_store %arg7[%c0_6, %c0_7], %7 {strides = array<i32>} : memref<128x128xf32, #tpu.memory_space<vmem>>, vector<128x128xf32>,
    %c0_i32_8 = arith.constant 0 : i32
    %9 = arith.cmpi eq, %arg2, %c0_i32_8 : i32
    %10 = arith.extui %9 : i1 to i32
    %c0_i32_9 = arith.constant 0 : i32
    %11 = arith.cmpi ne, %10, %c0_i32_9 : i32
    scf.if %11 {
      %c0_10 = arith.constant 0 : index
      %c0_11 = arith.constant 0 : index
      %12 = vector.load %arg7[%c0_10, %c0_11] : memref<128x128xf32, #tpu.memory_space<vmem>>, vector<128x128xf32>
      %c0_12 = arith.constant 0 : index
      %c0_13 = arith.constant 0 : index
      %13 = vector.load %arg5[%c0_12, %c0_13] : memref<1x128xf32, #tpu.memory_space<vmem>>, vector<1x128xf32>
      %14 = vector.broadcast %13 : vector<1x128xf32> to vector<128x128xf32>
      %15 = arith.addf %12, %14 : vector<128x128xf32>
      %c0_14 = arith.constant 0 : index
      %c0_15 = arith.constant 0 : index
      %16 = vector.load %arg6[%c0_14, %c0_15] : memref<128x128xf32, #tpu.memory_space<vmem>>, vector<128x128xf32>
      tpu.vector_store %arg6[%c0_14, %c0_15], %15 {strides = array<i32>} : memref<128x128xf32, #tpu.memory_space<vmem>>, vector<128x128xf32>,
    } else {
    }
    return
  }
  func.func @transform_0(%arg0: i32, %arg1: i32, %arg2: i32) -> (i32, i32) {
    %c0_i32 = arith.constant 0 : i32
    return %arg0, %arg2 : i32, i32
  }
  func.func @transform_1(%arg0: i32, %arg1: i32, %arg2: i32) -> (i32, i32) {
    %c0_i32 = arith.constant 0 : i32
    return %arg2, %arg1 : i32, i32
  }
  func.func @transform_2(%arg0: i32, %arg1: i32, %arg2: i32) -> (i32, i32) {
    %c0_i32 = arith.constant 0 : i32
    %c0_i32_0 = arith.constant 0 : i32
    return %c0_i32, %arg1 : i32, i32
  }
  func.func @transform_3(%arg0: i32, %arg1: i32, %arg2: i32) -> (i32, i32) {
    %c0_i32 = arith.constant 0 : i32
    return %arg0, %arg1 : i32, i32
  }
}

</mosaic_0001>

<llo_original>
// kernel: _lambda_.7
$region0: #{_lambda_.7}
  #allocation0 [shape = 'u32[]', space=smem, size = 0x4, offset = 0x4, fixed_abs, tag = 'smem constant byte address 0x4 - core index']
  #allocation1 [shape = 'u32[72,128]{1,0:T(1,128)}', space=vmem, size = 0x9000, scoped, tag = 'internal scratch']
  %s0 = inlined_call_operand.vmem [shape: f32[32,64], index: 0, kind: input, shape index: {}]
  %s1 = inlined_call_operand.vmem [shape: f32[1,64], index: 1, kind: input, shape index: {}]
  %s2 = inlined_call_operand.vmem [shape: f32[1,64], index: 2, kind: input, shape index: {}]
  %s3 = inlined_call_operand.vmem [shape: bf16[64,128], index: 3, kind: input, shape index: {}]
  %s4 = inlined_call_operand.vmem [shape: f32[1,128], index: 4, kind: input, shape index: {}]
  %s5 = inlined_call_operand.vmem [shape: f32[32,128], index: 5, kind: output, shape index: {}]
  %s6 = sld [smem:[#allocation0]]
  $region30: #{_lambda_.7} parent=0
    _
  %s8 = ssub.s32 1, %s6
  %s9 = scalar_select 0, %s8, %s6
  // Predicated region
  $region2: #{_lambda_.7} parent=0 // pred_check
    _
  $region3: #{_lambda_.7} parent=0 // pred_check_branch
    %11 = sbr.rel (0) target = $region5
  $region4: #{_lambda_.7} parent=0 // pred_region
    _
  $region5: #{_lambda_.7} parent=0 // pred_fallthru
    _
  // Predicated region
  $region6: #{_lambda_.7} parent=0 // pred_check
    _
  $region7: #{_lambda_.7} parent=0 // pred_check_branch
    %13 = sbr.rel (0) target = $region9
  $region8: #{_lambda_.7} parent=0 // pred_region
    _
  $region9: #{_lambda_.7} parent=0 // pred_fallthru
    _
  // Predicated region
  $region10: #{_lambda_.7} parent=0 // pred_check
    _
  $region11: #{_lambda_.7} parent=0 // pred_check_branch
    %15 = sbr.rel (0) target = $region13
  $region12: #{_lambda_.7} parent=0 // pred_region
    _
  $region13: #{_lambda_.7} parent=0 // pred_fallthru
    _
  // Predicated region
  $region14: #{_lambda_.7} parent=0 // pred_check
    _
  $region15: #{_lambda_.7} parent=0 // pred_check_branch
    %17 = sbr.rel (0) target = $region17
  $region16: #{_lambda_.7} parent=0 // pred_region
    _
  $region17: #{_lambda_.7} parent=0 // pred_fallthru
    _
  // Predicated region
  $region18: #{_lambda_.7} parent=0 // pred_check
    _
  $region19: #{_lambda_.7} parent=0 // pred_check_branch
    %19 = sbr.rel (0) target = $region21
  $region20: #{_lambda_.7} parent=0 // pred_region
    _
  $region21: #{_lambda_.7} parent=0 // pred_fallthru
    _
  %v21 = vld [vmem:[%s0] sm:$0xff]
  %v22 = vld [vmem:[%s0 + $0x8] sm:$0xff]
  %v23 = vld [vmem:[%s0 + $0x10] sm:$0xff]
  %v24 = vld [vmem:[%s0 + $0x18] sm:$0xff]
  %vm25 = vcmask 523264
  %v26 = vsel %vm25, %v21, 0.0
  %27 = vadd.xlane.f32.xlu0 %v26
  %v28 = vpop.xlane.xlu0 %27
  %v29 = vsel %vm25, %v22, 0.0
  %30 = vadd.xlane.f32.xlu0 %v29
  %v31 = vpop.xlane.xlu0 %30
  %v32 = vsel %vm25, %v23, 0.0
  %33 = vadd.xlane.f32.xlu0 %v32
  %v34 = vpop.xlane.xlu0 %33
  %v35 = vsel %vm25, %v24, 0.0
  %36 = vadd.xlane.f32.xlu0 %v35
  %v37 = vpop.xlane.xlu0 %36
  %v38 = vrcp.pop 64.0
  %v39 = vmul.f32 64.0, %v38
  %v40 = vsub.f32 1.0, %v39
  %v41 = vmul.f32 %v38, %v40
  %v42 = vadd.f32 %v38, %v41
  %vm43 = vweird.f32 %v38
  %v44 = vsel %vm43, %v38, %v42
  %v45 = vmul.f32 %v28, %v44
  %v46 = vmul.f32 %v31, %v44
  %v47 = vmul.f32 %v34, %v44
  %v48 = vmul.f32 %v37, %v44
  %v49 = vsub.f32 %v21, %v45
  %v50 = vsub.f32 %v22, %v46
  %v51 = vsub.f32 %v23, %v47
  %v52 = vsub.f32 %v24, %v48
  %v53 = vmul.f32 %v49, %v49
  %v54 = vmul.f32 %v50, %v50
  %v55 = vmul.f32 %v51, %v51
  %v56 = vmul.f32 %v52, %v52
  %v57 = vsel %vm25, %v53, 0.0
  %58 = vadd.xlane.f32.xlu0 %v57
  %v59 = vpop.xlane.xlu0 %58
  %v60 = vsel %vm25, %v54, 0.0
  %61 = vadd.xlane.f32.xlu0 %v60
  %v62 = vpop.xlane.xlu0 %61
  %v63 = vsel %vm25, %v55, 0.0
  %64 = vadd.xlane.f32.xlu0 %v63
  %v65 = vpop.xlane.xlu0 %64
  %v66 = vsel %vm25, %v56, 0.0
  %67 = vadd.xlane.f32.xlu0 %v66
  %v68 = vpop.xlane.xlu0 %67
  %v69 = vmul.f32 %v59, %v44
  %v70 = vmul.f32 %v62, %v44
  %v71 = vmul.f32 %v65, %v44
  %v72 = vmul.f32 %v68, %v44
  %v73 = vadd.f32 %v69, 1e-06
  %v74 = vadd.f32 %v70, 1e-06
  %v75 = vadd.f32 %v71, 1e-06
  %v76 = vadd.f32 %v72, 1e-06
  %v77 = vrsqrt.pop %v73
  %v78 = vmul.f32 %v77, %v73
  %v79 = vmul.f32 %v78, %v77
  %v80 = vmul.f32 0.5, %v79
  %v81 = vsub.f32 1.5, %v80
  %v82 = vmul.f32 %v77, %v81
  %vm83 = vweird.f32 %v73
  %vm84 = vweird.f32 %v77
  %vm85 = vmor %vm83, %vm84
  %v86 = vsel %vm85, %v77, %v82
  %v87 = vrsqrt.pop %v74
  %v88 = vmul.f32 %v87, %v74
  %v89 = vmul.f32 %v88, %v87
  %v90 = vmul.f32 0.5, %v89
  %v91 = vsub.f32 1.5, %v90
  %v92 = vmul.f32 %v87, %v91
  %vm93 = vweird.f32 %v74
  %vm94 = vweird.f32 %v87
  %vm95 = vmor %vm93, %vm94
  %v96 = vsel %vm95, %v87, %v92
  %v97 = vrsqrt.pop %v75
  %v98 = vmul.f32 %v97, %v75
  %v99 = vmul.f32 %v98, %v97
  %v100 = vmul.f32 0.5, %v99
  %v101 = vsub.f32 1.5, %v100
  %v102 = vmul.f32 %v97, %v101
  %vm103 = vweird.f32 %v75
  %vm104 = vweird.f32 %v97
  %vm105 = vmor %vm103, %vm104
  %v106 = vsel %vm105, %v97, %v102
  %v107 = vrsqrt.pop %v76
  %v108 = vmul.f32 %v107, %v76
  %v109 = vmul.f32 %v108, %v107
  %v110 = vmul.f32 0.5, %v109
  %v111 = vsub.f32 1.5, %v110
  %v112 = vmul.f32 %v107, %v111
  %vm113 = vweird.f32 %v76
  %vm114 = vweird.f32 %v107
  %vm115 = vmor %vm113, %vm114
  %v116 = vsel %vm115, %v107, %v112
  %v117 = vmul.f32 %v49, %v86
  %v118 = vmul.f32 %v50, %v96
  %v119 = vmul.f32 %v51, %v106
  %v120 = vmul.f32 %v52, %v116
  %v121 = vld [vmem:[%s1] sm:$0x1]
  %v123 = vperm.slane %v121, 0
  %v125 = vmul.f32 %v117, %v123
  %v126 = vmul.f32 %v118, %v123
  %v127 = vmul.f32 %v119, %v123
  %v128 = vmul.f32 %v120, %v123
  %v129 = vld [vmem:[%s2] sm:$0x1]
  %v131 = vperm.slane %v129, 0
  %v133 = vadd.f32 %v125, %v131
  %v134 = vadd.f32 %v126, %v131
  %v135 = vadd.f32 %v127, %v131
  %v136 = vadd.f32 %v128, %v131
  %v137 = vpack.c.bf16 %v134, %v133
  %v138 = vpack.c.bf16 %v136, %v135
  %v139 = vld [vmem:[%s3] sm:$0xf]
  %v140 = vld [vmem:[%s3 + $0x4] sm:$0xf]
  %v141 = vld [vmem:[%s3 + $0x8] sm:$0xf]
  %v142 = vld [vmem:[%s3 + $0xc] sm:$0xf]
  %v143 = vld [vmem:[%s3 + $0x10] sm:$0xf]
  %v144 = vld [vmem:[%s3 + $0x14] sm:$0xf]
  %v145 = vld [vmem:[%s3 + $0x18] sm:$0xf]
  %v146 = vld [vmem:[%s3 + $0x1c] sm:$0xf]
  %v147 = vld [vmem:[%s4] sm:$0x1]
  %v149 = vperm.slane %v147, 0
  %v159 = vunpack.c.l.b16 %v139
  %v160 = vunpack.c.l.b16 %v140
  %v161 = vunpack.c.l.b16 %v141
  %v162 = vunpack.c.l.b16 %v142
  %v163 = vunpack.c.l.b16 %v143
  %v164 = vunpack.c.l.b16 %v144
  %v165 = vunpack.c.l.b16 %v145
  %v166 = vunpack.c.l.b16 %v146
  %v167 = vpack.c.b16 %v160, %v159
  %v168 = vpack.c.b16 %v162, %v161
  %v169 = vpack.c.b16 %v164, %v163
  %v170 = vpack.c.b16 %v166, %v165
  %v176 = vsel %vm25, %v137, 0
  %v179 = vsel %vm25, %v138, 0
  %181 = vmatpush.bf16.msra.mxu0 0
  %182 = vmatpush.bf16.msra.mxu0 0
  %183 = vmatpush.bf16.msra.mxu0 0
  %184 = vmatpush.bf16.msra.mxu0 0
  %185 = vmatpush.bf16.msra.mxu0 %v170
  %186 = vmatpush.bf16.msra.mxu0 %v169
  %187 = vmatpush.bf16.msra.mxu0 %v168
  %188 = vmatpush.bf16.msra.mxu0 %v167
  %189 = vmatmul.bf16.gmra.mxu0 %v176
  %v190 = vpop.f32.mrf.mxu0
  %v191 = vadd.f32 %v149, %v190
  %v192 = vpop.f32.mrf.mxu0
  %v193 = vadd.f32 %v149, %v192
  %194 = vmatmul.bf16.gmra.mxu0 %v179
  %v195 = vpop.f32.mrf.mxu0
  %v196 = vadd.f32 %v149, %v195
  %v197 = vpop.f32.mrf.mxu0
  %v198 = vadd.f32 %v149, %v197
  %199 = vdwg.mxu0
  %200 = vst [vmem:[%s5] sm:$0xff] %v191
  %201 = vst [vmem:[%s5 + $0x8] sm:$0xff] %v193
  %202 = vst [vmem:[%s5 + $0x10] sm:$0xff] %v196
  %203 = vst [vmem:[%s5 + $0x18] sm:$0xff] %v198
  // Predicated region
  $region22: #{_lambda_.7} parent=0 // pred_check
    _
  $region23: #{_lambda_.7} parent=0 // pred_check_branch
    %205 = sbr.rel (0) target = $region25
  $region24: #{_lambda_.7} parent=0 // pred_region
    _
  $region25: #{_lambda_.7} parent=0 // pred_fallthru
    _
  // Predicated region
  $region26: #{_lambda_.7} parent=0 // pred_check
    _
  $region27: #{_lambda_.7} parent=0 // pred_check_branch
    %207 = sbr.rel (0) target = $region29
  $region28: #{_lambda_.7} parent=0 // pred_region
    _
  $region29: #{_lambda_.7} parent=0 // pred_fallthru
    _

// kernel: _lambda_.5
$region0: #{_lambda_.5}
  #allocation0 [shape = 'u32[]', space=smem, size = 0x4, offset = 0x4, fixed_abs, tag = 'smem constant byte address 0x4 - core index']
  #allocation1 [shape = 'u32[72,128]{1,0:T(1,128)}', space=vmem, size = 0x9000, scoped, tag = 'internal scratch']
  #allocation2 [shape = 'f32[128,128]{1,0:T(8,128)}', space=vmem, size = 0x10000, scoped, tag = 'scratch operand']
  %s0 = inlined_call_operand.vmem [shape: bf16[128,128], index: 0, kind: input, shape index: {}]
  %s1 = inlined_call_operand.vmem [shape: bf16[128,128], index: 1, kind: input, shape index: {}]
  %s2 = inlined_call_operand.vmem [shape: f32[1,128], index: 2, kind: input, shape index: {}]
  %s3 = inlined_call_operand.vmem [shape: f32[128,128], index: 3, kind: output, shape index: {}]
  %s4 = sld [smem:[#allocation0]]
  $region30: #{_lambda_.5} parent=0
    _
  %s6 = ssub.s32 1, %s4
  %s7 = scalar_select 0, %s6, %s4
  // Predicated region
  $region2: #{_lambda_.5} parent=0 // pred_check
    _
  $region3: #{_lambda_.5} parent=0 // pred_check_branch
    %9 = sbr.rel (0) target = $region5
  $region4: #{_lambda_.5} parent=0 // pred_region
    _
  $region5: #{_lambda_.5} parent=0 // pred_fallthru
    _
  // Predicated region
  $region6: #{_lambda_.5} parent=0 // pred_check
    _
  $region7: #{_lambda_.5} parent=0 // pred_check_branch
    %11 = sbr.rel (0) target = $region9
  $region8: #{_lambda_.5} parent=0 // pred_region
    _
  $region9: #{_lambda_.5} parent=0 // pred_fallthru
    _
  // Predicated region
  $region10: #{_lambda_.5} parent=0 // pred_check
    _
  $region11: #{_lambda_.5} parent=0 // pred_check_branch
    %13 = sbr.rel (0) target = $region13
  $region12: #{_lambda_.5} parent=0 // pred_region
    _
  $region13: #{_lambda_.5} parent=0 // pred_fallthru
    _
  %p14 = scmp.eq.s32.totalorder 0, 0
  // Predicated region
  $region14: #{_lambda_.5} parent=0 // pred_check
    %p15 = pneg %p14
  $region15: #{_lambda_.5} parent=0 // pred_check_branch
    %17 = sbr.rel (%p15) target = $region17
  $region16: #{_lambda_.5} parent=0 // pred_region
    %18 = vst [vmem:[#allocation2] sm:$0xff] 0.0
    %19 = vst [vmem:[#allocation2 + $0x8] sm:$0xff] 0.0
    %20 = vst [vmem:[#allocation2 + $0x10] sm:$0xff] 0.0
    %21 = vst [vmem:[#allocation2 + $0x18] sm:$0xff] 0.0
    %22 = vst [vmem:[#allocation2 + $0x20] sm:$0xff] 0.0
    %23 = vst [vmem:[#allocation2 + $0x28] sm:$0xff] 0.0
    %24 = vst [vmem:[#allocation2 + $0x30] sm:$0xff] 0.0
    %25 = vst [vmem:[#allocation2 + $0x38] sm:$0xff] 0.0
    %26 = vst [vmem:[#allocation2 + $0x40] sm:$0xff] 0.0
    %27 = vst [vmem:[#allocation2 + $0x48] sm:$0xff] 0.0
    %28 = vst [vmem:[#allocation2 + $0x50] sm:$0xff] 0.0
    %29 = vst [vmem:[#allocation2 + $0x58] sm:$0xff] 0.0
    %30 = vst [vmem:[#allocation2 + $0x60] sm:$0xff] 0.0
    %31 = vst [vmem:[#allocation2 + $0x68] sm:$0xff] 0.0
    %32 = vst [vmem:[#allocation2 + $0x70] sm:$0xff] 0.0
    %33 = vst [vmem:[#allocation2 + $0x78] sm:$0xff] 0.0
  $region17: #{_lambda_.5} parent=0 // pred_fallthru
    _
  %v34 = vld [vmem:[#allocation2] sm:$0xff]
  %v35 = vld [vmem:[#allocation2 + $0x8] sm:$0xff]
  %v36 = vld [vmem:[#allocation2 + $0x10] sm:$0xff]
  %v37 = vld [vmem:[#allocation2 + $0x18] sm:$0xff]
  %v38 = vld [vmem:[#allocation2 + $0x20] sm:$0xff]
  %v39 = vld [vmem:[#allocation2 + $0x28] sm:$0xff]
  %v40 = vld [vmem:[#allocation2 + $0x30] sm:$0xff]
  %v41 = vld [vmem:[#allocation2 + $0x38] sm:$0xff]
  %v42 = vld [vmem:[#allocation2 + $0x40] sm:$0xff]
  %v43 = vld [vmem:[#allocation2 + $0x48] sm:$0xff]
  %v44 = vld [vmem:[#allocation2 + $0x50] sm:$0xff]
  %v45 = vld [vmem:[#allocation2 + $0x58] sm:$0xff]
  %v46 = vld [vmem:[#allocation2 + $0x60] sm:$0xff]
  %v47 = vld [vmem:[#allocation2 + $0x68] sm:$0xff]
  %v48 = vld [vmem:[#allocation2 + $0x70] sm:$0xff]
  %v49 = vld [vmem:[#allocation2 + $0x78] sm:$0xff]
  %v50 = vld [vmem:[%s0] sm:$0xf]
  %v51 = vld [vmem:[%s0 + $0x4] sm:$0xf]
  %v52 = vld [vmem:[%s0 + $0x8] sm:$0xf]
  %v53 = vld [vmem:[%s0 + $0xc] sm:$0xf]
  %v54 = vld [vmem:[%s0 + $0x10] sm:$0xf]
  %v55 = vld [vmem:[%s0 + $0x14] sm:$0xf]
  %v56 = vld [vmem:[%s0 + $0x18] sm:$0xf]
  %v57 = vld [vmem:[%s0 + $0x1c] sm:$0xf]
  %v58 = vld [vmem:[%s0 + $0x20] sm:$0xf]
  %v59 = vld [vmem:[%s0 + $0x24] sm:$0xf]
  %v60 = vld [vmem:[%s0 + $0x28] sm:$0xf]
  %v61 = vld [vmem:[%s0 + $0x2c] sm:$0xf]
  %v62 = vld [vmem:[%s0 + $0x30] sm:$0xf]
  %v63 = vld [vmem:[%s0 + $0x34] sm:$0xf]
  %v64 = vld [vmem:[%s0 + $0x38] sm:$0xf]
  %v65 = vld [vmem:[%s0 + $0x3c] sm:$0xf]
  %v66 = vld [vmem:[%s1] sm:$0xf]
  %v67 = vld [vmem:[%s1 + $0x4] sm:$0xf]
  %v68 = vld [vmem:[%s1 + $0x8] sm:$0xf]
  %v69 = vld [vmem:[%s1 + $0xc] sm:$0xf]
  %v70 = vld [vmem:[%s1 + $0x10] sm:$0xf]
  %v71 = vld [vmem:[%s1 + $0x14] sm:$0xf]
  %v72 = vld [vmem:[%s1 + $0x18] sm:$0xf]
  %v73 = vld [vmem:[%s1 + $0x1c] sm:$0xf]
  %v74 = vld [vmem:[%s1 + $0x20] sm:$0xf]
  %v75 = vld [vmem:[%s1 + $0x24] sm:$0xf]
  %v76 = vld [vmem:[%s1 + $0x28] sm:$0xf]
  %v77 = vld [vmem:[%s1 + $0x2c] sm:$0xf]
  %v78 = vld [vmem:[%s1 + $0x30] sm:$0xf]
  %v79 = vld [vmem:[%s1 + $0x34] sm:$0xf]
  %v80 = vld [vmem:[%s1 + $0x38] sm:$0xf]
  %v81 = vld [vmem:[%s1 + $0x3c] sm:$0xf]
  %v98 = vunpack.c.l.b16 %v50
  %v99 = vunpack.c.l.b16 %v51
  %v100 = vunpack.c.l.b16 %v52
  %v101 = vunpack.c.l.b16 %v53
  %v102 = vunpack.c.l.b16 %v54
  %v103 = vunpack.c.l.b16 %v55
  %v104 = vunpack.c.l.b16 %v56
  %v105 = vunpack.c.l.b16 %v57
  %v106 = vunpack.c.l.b16 %v58
  %v107 = vunpack.c.l.b16 %v59
  %v108 = vunpack.c.l.b16 %v60
  %v109 = vunpack.c.l.b16 %v61
  %v110 = vunpack.c.l.b16 %v62
  %v111 = vunpack.c.l.b16 %v63
  %v112 = vunpack.c.l.b16 %v64
  %v113 = vunpack.c.l.b16 %v65
  %v114 = vpack.c.b16 %v99, %v98
  %v115 = vpack.c.b16 %v101, %v100
  %v116 = vpack.c.b16 %v103, %v102
  %v117 = vpack.c.b16 %v105, %v104
  %v118 = vpack.c.b16 %v107, %v106
  %v119 = vpack.c.b16 %v109, %v108
  %v120 = vpack.c.b16 %v111, %v110
  %v121 = vpack.c.b16 %v113, %v112
  %v146 = vunpack.c.l.b16 %v66
  %v147 = vunpack.c.l.b16 %v67
  %v148 = vunpack.c.l.b16 %v68
  %v149 = vunpack.c.l.b16 %v69
  %v150 = vunpack.c.l.b16 %v70
  %v151 = vunpack.c.l.b16 %v71
  %v152 = vunpack.c.l.b16 %v72
  %v153 = vunpack.c.l.b16 %v73
  %v154 = vunpack.c.l.b16 %v74
  %v155 = vunpack.c.l.b16 %v75
  %v156 = vunpack.c.l.b16 %v76
  %v157 = vunpack.c.l.b16 %v77
  %v158 = vunpack.c.l.b16 %v78
  %v159 = vunpack.c.l.b16 %v79
  %v160 = vunpack.c.l.b16 %v80
  %v161 = vunpack.c.l.b16 %v81
  %v162 = vpack.c.b16 %v147, %v146
  %v163 = vpack.c.b16 %v149, %v148
  %v164 = vpack.c.b16 %v151, %v150
  %v165 = vpack.c.b16 %v153, %v152
  %v166 = vpack.c.b16 %v155, %v154
  %v167 = vpack.c.b16 %v157, %v156
  %v168 = vpack.c.b16 %v159, %v158
  %v169 = vpack.c.b16 %v161, %v160
  %178 = vmatpush.bf16.msra.mxu0 %v169
  %179 = vmatpush.bf16.msra.mxu0 %v168
  %180 = vmatpush.bf16.msra.mxu0 %v167
  %181 = vmatpush.bf16.msra.mxu0 %v166
  %182 = vmatpush.bf16.msra.mxu0 %v165
  %183 = vmatpush.bf16.msra.mxu0 %v164
  %184 = vmatpush.bf16.msra.mxu0 %v163
  %185 = vmatpush.bf16.msra.mxu0 %v162
  %186 = vmatmul.bf16.gmra.mxu0 %v114
  %v187 = vpop.f32.mrf.mxu0
  %v188 = vadd.f32 0.0, %v187
  %v189 = vpop.f32.mrf.mxu0
  %v190 = vadd.f32 0.0, %v189
  %191 = vmatmul.bf16.gmra.mxu0 %v115
  %v192 = vpop.f32.mrf.mxu0
  %v193 = vadd.f32 0.0, %v192
  %v194 = vpop.f32.mrf.mxu0
  %v195 = vadd.f32 0.0, %v194
  %196 = vmatmul.bf16.gmra.mxu0 %v116
  %v197 = vpop.f32.mrf.mxu0
  %v198 = vadd.f32 0.0, %v197
  %v199 = vpop.f32.mrf.mxu0
  %v200 = vadd.f32 0.0, %v199
  %201 = vmatmul.bf16.gmra.mxu0 %v117
  %v202 = vpop.f32.mrf.mxu0
  %v203 = vadd.f32 0.0, %v202
  %v204 = vpop.f32.mrf.mxu0
  %v205 = vadd.f32 0.0, %v204
  %206 = vmatmul.bf16.gmra.mxu0 %v118
  %v207 = vpop.f32.mrf.mxu0
  %v208 = vadd.f32 0.0, %v207
  %v209 = vpop.f32.mrf.mxu0
  %v210 = vadd.f32 0.0, %v209
  %211 = vmatmul.bf16.gmra.mxu0 %v119
  %v212 = vpop.f32.mrf.mxu0
  %v213 = vadd.f32 0.0, %v212
  %v214 = vpop.f32.mrf.mxu0
  %v215 = vadd.f32 0.0, %v214
  %216 = vmatmul.bf16.gmra.mxu0 %v120
  %v217 = vpop.f32.mrf.mxu0
  %v218 = vadd.f32 0.0, %v217
  %v219 = vpop.f32.mrf.mxu0
  %v220 = vadd.f32 0.0, %v219
  %221 = vmatmul.bf16.gmra.mxu0 %v121
  %v222 = vpop.f32.mrf.mxu0
  %v223 = vadd.f32 0.0, %v222
  %v224 = vpop.f32.mrf.mxu0
  %v225 = vadd.f32 0.0, %v224
  %226 = vdwg.mxu0
  %v227 = vadd.f32 %v34, %v188
  %v228 = vadd.f32 %v35, %v190
  %v229 = vadd.f32 %v36, %v193
  %v230 = vadd.f32 %v37, %v195
  %v231 = vadd.f32 %v38, %v198
  %v232 = vadd.f32 %v39, %v200
  %v233 = vadd.f32 %v40, %v203
  %v234 = vadd.f32 %v41, %v205
  %v235 = vadd.f32 %v42, %v208
  %v236 = vadd.f32 %v43, %v210
  %v237 = vadd.f32 %v44, %v213
  %v238 = vadd.f32 %v45, %v215
  %v239 = vadd.f32 %v46, %v218
  %v240 = vadd.f32 %v47, %v220
  %v241 = vadd.f32 %v48, %v223
  %v242 = vadd.f32 %v49, %v225
  %243 = vst [vmem:[#allocation2] sm:$0xff] %v227
  %244 = vst [vmem:[#allocation2 + $0x8] sm:$0xff] %v228
  %245 = vst [vmem:[#allocation2 + $0x10] sm:$0xff] %v229
  %246 = vst [vmem:[#allocation2 + $0x18] sm:$0xff] %v230
  %247 = vst [vmem:[#allocation2 + $0x20] sm:$0xff] %v231
  %248 = vst [vmem:[#allocation2 + $0x28] sm:$0xff] %v232
  %249 = vst [vmem:[#allocation2 + $0x30] sm:$0xff] %v233
  %250 = vst [vmem:[#allocation2 + $0x38] sm:$0xff] %v234
  %251 = vst [vmem:[#allocation2 + $0x40] sm:$0xff] %v235
  %252 = vst [vmem:[#allocation2 + $0x48] sm:$0xff] %v236
  %253 = vst [vmem:[#allocation2 + $0x50] sm:$0xff] %v237
  %254 = vst [vmem:[#allocation2 + $0x58] sm:$0xff] %v238
  %255 = vst [vmem:[#allocation2 + $0x60] sm:$0xff] %v239
  %256 = vst [vmem:[#allocation2 + $0x68] sm:$0xff] %v240
  %257 = vst [vmem:[#allocation2 + $0x70] sm:$0xff] %v241
  %258 = vst [vmem:[#allocation2 + $0x78] sm:$0xff] %v242
  // Predicated region
  $region18: #{_lambda_.5} parent=0 // pred_check
    %p259 = pneg %p14
  $region19: #{_lambda_.5} parent=0 // pred_check_branch
    %261 = sbr.rel (%p259) target = $region21
  $region20: #{_lambda_.5} parent=0 // pred_region
    %v262 = vld [vmem:[#allocation2] sm:$0xff]
    %v263 = vld [vmem:[#allocation2 + $0x8] sm:$0xff]
    %v264 = vld [vmem:[#allocation2 + $0x10] sm:$0xff]
    %v265 = vld [vmem:[#allocation2 + $0x18] sm:$0xff]
    %v266 = vld [vmem:[#allocation2 + $0x20] sm:$0xff]
    %v267 = vld [vmem:[#allocation2 + $0x28] sm:$0xff]
    %v268 = vld [vmem:[#allocation2 + $0x30] sm:$0xff]
    %v269 = vld [vmem:[#allocation2 + $0x38] sm:$0xff]
    %v270 = vld [vmem:[#allocation2 + $0x40] sm:$0xff]
    %v271 = vld [vmem:[#allocation2 + $0x48] sm:$0xff]
    %v272 = vld [vmem:[#allocation2 + $0x50] sm:$0xff]
    %v273 = vld [vmem:[#allocation2 + $0x58] sm:$0xff]
    %v274 = vld [vmem:[#allocation2 + $0x60] sm:$0xff]
    %v275 = vld [vmem:[#allocation2 + $0x68] sm:$0xff]
    %v276 = vld [vmem:[#allocation2 + $0x70] sm:$0xff]
    %v277 = vld [vmem:[#allocation2 + $0x78] sm:$0xff]
    %v278 = vld [vmem:[%s2] sm:$0x1]
    %v280 = vperm.slane %v278, 0
    %v282 = vadd.f32 %v262, %v280
    %v283 = vadd.f32 %v263, %v280
    %v284 = vadd.f32 %v264, %v280
    %v285 = vadd.f32 %v265, %v280
    %v286 = vadd.f32 %v266, %v280
    %v287 = vadd.f32 %v267, %v280
    %v288 = vadd.f32 %v268, %v280
    %v289 = vadd.f32 %v269, %v280
    %v290 = vadd.f32 %v270, %v280
    %v291 = vadd.f32 %v271, %v280
    %v292 = vadd.f32 %v272, %v280
    %v293 = vadd.f32 %v273, %v280
    %v294 = vadd.f32 %v274, %v280
    %v295 = vadd.f32 %v275, %v280
    %v296 = vadd.f32 %v276, %v280
    %v297 = vadd.f32 %v277, %v280
    %298 = vst [vmem:[%s3] sm:$0xff] %v282
    %299 = vst [vmem:[%s3 + $0x8] sm:$0xff] %v283
    %300 = vst [vmem:[%s3 + $0x10] sm:$0xff] %v284
    %301 = vst [vmem:[%s3 + $0x18] sm:$0xff] %v285
    %302 = vst [vmem:[%s3 + $0x20] sm:$0xff] %v286
    %303 = vst [vmem:[%s3 + $0x28] sm:$0xff] %v287
    %304 = vst [vmem:[%s3 + $0x30] sm:$0xff] %v288
    %305 = vst [vmem:[%s3 + $0x38] sm:$0xff] %v289
    %306 = vst [vmem:[%s3 + $0x40] sm:$0xff] %v290
    %307 = vst [vmem:[%s3 + $0x48] sm:$0xff] %v291
    %308 = vst [vmem:[%s3 + $0x50] sm:$0xff] %v292
    %309 = vst [vmem:[%s3 + $0x58] sm:$0xff] %v293
    %310 = vst [vmem:[%s3 + $0x60] sm:$0xff] %v294
    %311 = vst [vmem:[%s3 + $0x68] sm:$0xff] %v295
    %312 = vst [vmem:[%s3 + $0x70] sm:$0xff] %v296
    %313 = vst [vmem:[%s3 + $0x78] sm:$0xff] %v297
  $region21: #{_lambda_.5} parent=0 // pred_fallthru
    _
  // Predicated region
  $region22: #{_lambda_.5} parent=0 // pred_check
    _
  $region23: #{_lambda_.5} parent=0 // pred_check_branch
    %315 = sbr.rel (0) target = $region25
  $region24: #{_lambda_.5} parent=0 // pred_region
    _
  $region25: #{_lambda_.5} parent=0 // pred_fallthru
    _
  // Predicated region
  $region26: #{_lambda_.5} parent=0 // pred_check
    _
  $region27: #{_lambda_.5} parent=0 // pred_check_branch
    %317 = sbr.rel (0) target = $region29
  $region28: #{_lambda_.5} parent=0 // pred_region
    _
  $region29: #{_lambda_.5} parent=0 // pred_fallthru
    _

// kernel: _lambda_.6
$region0: #{_lambda_.6}
  #allocation0 [shape = 'u32[]', space=smem, size = 0x4, offset = 0x4, fixed_abs, tag = 'smem constant byte address 0x4 - core index']
  #allocation1 [shape = 'u32[72,128]{1,0:T(1,128)}', space=vmem, size = 0x9000, scoped, tag = 'internal scratch']
  #allocation2 [shape = 'f32[32,128]{1,0:T(8,128)}', space=vmem, size = 0x4000, scoped, tag = 'scratch operand']
  %s0 = inlined_call_operand.vmem [shape: bf16[32,256], index: 0, kind: input, shape index: {}]
  %s1 = inlined_call_operand.vmem [shape: bf16[256,128], index: 1, kind: input, shape index: {}]
  %s2 = inlined_call_operand.vmem [shape: f32[1,128], index: 2, kind: input, shape index: {}]
  %s3 = inlined_call_operand.vmem [shape: f32[32,128], index: 3, kind: output, shape index: {}]
  %s4 = sld [smem:[#allocation0]]
  $region30: #{_lambda_.6} parent=0
    _
  %s6 = ssub.s32 1, %s4
  %s7 = scalar_select 0, %s6, %s4
  // Predicated region
  $region2: #{_lambda_.6} parent=0 // pred_check
    _
  $region3: #{_lambda_.6} parent=0 // pred_check_branch
    %9 = sbr.rel (0) target = $region5
  $region4: #{_lambda_.6} parent=0 // pred_region
    _
  $region5: #{_lambda_.6} parent=0 // pred_fallthru
    _
  // Predicated region
  $region6: #{_lambda_.6} parent=0 // pred_check
    _
  $region7: #{_lambda_.6} parent=0 // pred_check_branch
    %11 = sbr.rel (0) target = $region9
  $region8: #{_lambda_.6} parent=0 // pred_region
    _
  $region9: #{_lambda_.6} parent=0 // pred_fallthru
    _
  // Predicated region
  $region10: #{_lambda_.6} parent=0 // pred_check
    _
  $region11: #{_lambda_.6} parent=0 // pred_check_branch
    %13 = sbr.rel (0) target = $region13
  $region12: #{_lambda_.6} parent=0 // pred_region
    _
  $region13: #{_lambda_.6} parent=0 // pred_fallthru
    _
  %p14 = scmp.eq.s32.totalorder 0, 0
  // Predicated region
  $region14: #{_lambda_.6} parent=0 // pred_check
    %p15 = pneg %p14
  $region15: #{_lambda_.6} parent=0 // pred_check_branch
    %17 = sbr.rel (%p15) target = $region17
  $region16: #{_lambda_.6} parent=0 // pred_region
    %18 = vst [vmem:[#allocation2] sm:$0xff] 0.0
    %19 = vst [vmem:[#allocation2 + $0x8] sm:$0xff] 0.0
    %20 = vst [vmem:[#allocation2 + $0x10] sm:$0xff] 0.0
    %21 = vst [vmem:[#allocation2 + $0x18] sm:$0xff] 0.0
  $region17: #{_lambda_.6} parent=0 // pred_fallthru
    _
  %v22 = vld [vmem:[#allocation2] sm:$0xff]
  %v23 = vld [vmem:[#allocation2 + $0x8] sm:$0xff]
  %v24 = vld [vmem:[#allocation2 + $0x10] sm:$0xff]
  %v25 = vld [vmem:[#allocation2 + $0x18] sm:$0xff]
  %v26 = vld [vmem:[%s0] sm:$0xff]
  %v27 = vld [vmem:[%s0 + $0x8] sm:$0xff]
  %v28 = vld [vmem:[%s0 + $0x10] sm:$0xff]
  %v29 = vld [vmem:[%s0 + $0x18] sm:$0xff]
  %v30 = vld [vmem:[%s1] sm:$0xf]
  %v31 = vld [vmem:[%s1 + $0x4] sm:$0xf]
  %v32 = vld [vmem:[%s1 + $0x8] sm:$0xf]
  %v33 = vld [vmem:[%s1 + $0xc] sm:$0xf]
  %v34 = vld [vmem:[%s1 + $0x10] sm:$0xf]
  %v35 = vld [vmem:[%s1 + $0x14] sm:$0xf]
  %v36 = vld [vmem:[%s1 + $0x18] sm:$0xf]
  %v37 = vld [vmem:[%s1 + $0x1c] sm:$0xf]
  %v38 = vld [vmem:[%s1 + $0x20] sm:$0xf]
  %v39 = vld [vmem:[%s1 + $0x24] sm:$0xf]
  %v40 = vld [vmem:[%s1 + $0x28] sm:$0xf]
  %v41 = vld [vmem:[%s1 + $0x2c] sm:$0xf]
  %v42 = vld [vmem:[%s1 + $0x30] sm:$0xf]
  %v43 = vld [vmem:[%s1 + $0x34] sm:$0xf]
  %v44 = vld [vmem:[%s1 + $0x38] sm:$0xf]
  %v45 = vld [vmem:[%s1 + $0x3c] sm:$0xf]
  %v46 = vld [vmem:[%s1 + $0x40] sm:$0xf]
  %v47 = vld [vmem:[%s1 + $0x44] sm:$0xf]
  %v48 = vld [vmem:[%s1 + $0x48] sm:$0xf]
  %v49 = vld [vmem:[%s1 + $0x4c] sm:$0xf]
  %v50 = vld [vmem:[%s1 + $0x50] sm:$0xf]
  %v51 = vld [vmem:[%s1 + $0x54] sm:$0xf]
  %v52 = vld [vmem:[%s1 + $0x58] sm:$0xf]
  %v53 = vld [vmem:[%s1 + $0x5c] sm:$0xf]
  %v54 = vld [vmem:[%s1 + $0x60] sm:$0xf]
  %v55 = vld [vmem:[%s1 + $0x64] sm:$0xf]
  %v56 = vld [vmem:[%s1 + $0x68] sm:$0xf]
  %v57 = vld [vmem:[%s1 + $0x6c] sm:$0xf]
  %v58 = vld [vmem:[%s1 + $0x70] sm:$0xf]
  %v59 = vld [vmem:[%s1 + $0x74] sm:$0xf]
  %v60 = vld [vmem:[%s1 + $0x78] sm:$0xf]
  %v61 = vld [vmem:[%s1 + $0x7c] sm:$0xf]
  %v66 = vunpack.c.l.b16 %v26
  %v67 = vunpack.c.h.b16 %v26
  %v68 = vunpack.c.l.b16 %v27
  %v69 = vunpack.c.h.b16 %v27
  %v70 = vunpack.c.l.b16 %v28
  %v71 = vunpack.c.h.b16 %v28
  %v72 = vunpack.c.l.b16 %v29
  %v73 = vunpack.c.h.b16 %v29
  %v74 = vpack.c.b16 %v68, %v66
  %v75 = vpack.c.b16 %v69, %v67
  %v76 = vpack.c.b16 %v72, %v70
  %v77 = vpack.c.b16 %v73, %v71
  %v114 = vunpack.c.l.b16 %v30
  %v115 = vunpack.c.l.b16 %v31
  %v116 = vunpack.c.l.b16 %v32
  %v117 = vunpack.c.l.b16 %v33
  %v118 = vunpack.c.l.b16 %v34
  %v119 = vunpack.c.l.b16 %v35
  %v120 = vunpack.c.l.b16 %v36
  %v121 = vunpack.c.l.b16 %v37
  %v122 = vunpack.c.l.b16 %v38
  %v123 = vunpack.c.l.b16 %v39
  %v124 = vunpack.c.l.b16 %v40
  %v125 = vunpack.c.l.b16 %v41
  %v126 = vunpack.c.l.b16 %v42
  %v127 = vunpack.c.l.b16 %v43
  %v128 = vunpack.c.l.b16 %v44
  %v129 = vunpack.c.l.b16 %v45
  %v130 = vunpack.c.l.b16 %v46
  %v131 = vunpack.c.l.b16 %v47
  %v132 = vunpack.c.l.b16 %v48
  %v133 = vunpack.c.l.b16 %v49
  %v134 = vunpack.c.l.b16 %v50
  %v135 = vunpack.c.l.b16 %v51
  %v136 = vunpack.c.l.b16 %v52
  %v137 = vunpack.c.l.b16 %v53
  %v138 = vunpack.c.l.b16 %v54
  %v139 = vunpack.c.l.b16 %v55
  %v140 = vunpack.c.l.b16 %v56
  %v141 = vunpack.c.l.b16 %v57
  %v142 = vunpack.c.l.b16 %v58
  %v143 = vunpack.c.l.b16 %v59
  %v144 = vunpack.c.l.b16 %v60
  %v145 = vunpack.c.l.b16 %v61
  %v146 = vpack.c.b16 %v115, %v114
  %v147 = vpack.c.b16 %v117, %v116
  %v148 = vpack.c.b16 %v119, %v118
  %v149 = vpack.c.b16 %v121, %v120
  %v150 = vpack.c.b16 %v123, %v122
  %v151 = vpack.c.b16 %v125, %v124
  %v152 = vpack.c.b16 %v127, %v126
  %v153 = vpack.c.b16 %v129, %v128
  %v154 = vpack.c.b16 %v131, %v130
  %v155 = vpack.c.b16 %v133, %v132
  %v156 = vpack.c.b16 %v135, %v134
  %v157 = vpack.c.b16 %v137, %v136
  %v158 = vpack.c.b16 %v139, %v138
  %v159 = vpack.c.b16 %v141, %v140
  %v160 = vpack.c.b16 %v143, %v142
  %v161 = vpack.c.b16 %v145, %v144
  %178 = vmatpush.bf16.msra.mxu0 %v153
  %179 = vmatpush.bf16.msra.mxu0 %v152
  %180 = vmatpush.bf16.msra.mxu0 %v151
  %181 = vmatpush.bf16.msra.mxu0 %v150
  %182 = vmatpush.bf16.msra.mxu0 %v149
  %183 = vmatpush.bf16.msra.mxu0 %v148
  %184 = vmatpush.bf16.msra.mxu0 %v147
  %185 = vmatpush.bf16.msra.mxu0 %v146
  %186 = vmatmul.bf16.gmra.mxu0 %v74
  %v187 = vpop.f32.mrf.mxu0
  %v188 = vadd.f32 0.0, %v187
  %v189 = vpop.f32.mrf.mxu0
  %v190 = vadd.f32 0.0, %v189
  %191 = vmatmul.bf16.gmra.mxu0 %v76
  %v192 = vpop.f32.mrf.mxu0
  %v193 = vadd.f32 0.0, %v192
  %v194 = vpop.f32.mrf.mxu0
  %v195 = vadd.f32 0.0, %v194
  %196 = vdwg.mxu0
  %197 = vmatpush.bf16.msra.mxu0 %v161
  %198 = vmatpush.bf16.msra.mxu0 %v160
  %199 = vmatpush.bf16.msra.mxu0 %v159
  %200 = vmatpush.bf16.msra.mxu0 %v158
  %201 = vmatpush.bf16.msra.mxu0 %v157
  %202 = vmatpush.bf16.msra.mxu0 %v156
  %203 = vmatpush.bf16.msra.mxu0 %v155
  %204 = vmatpush.bf16.msra.mxu0 %v154
  %205 = vmatmul.bf16.gmra.mxu0 %v75
  %v206 = vpop.f32.mrf.mxu0
  %v207 = vadd.f32 %v188, %v206
  %v208 = vpop.f32.mrf.mxu0
  %v209 = vadd.f32 %v190, %v208
  %210 = vmatmul.bf16.gmra.mxu0 %v77
  %v211 = vpop.f32.mrf.mxu0
  %v212 = vadd.f32 %v193, %v211
  %v213 = vpop.f32.mrf.mxu0
  %v214 = vadd.f32 %v195, %v213
  %215 = vdwg.mxu0
  %v216 = vadd.f32 %v22, %v207
  %v217 = vadd.f32 %v23, %v209
  %v218 = vadd.f32 %v24, %v212
  %v219 = vadd.f32 %v25, %v214
  %220 = vst [vmem:[#allocation2] sm:$0xff] %v216
  %221 = vst [vmem:[#allocation2 + $0x8] sm:$0xff] %v217
  %222 = vst [vmem:[#allocation2 + $0x10] sm:$0xff] %v218
  %223 = vst [vmem:[#allocation2 + $0x18] sm:$0xff] %v219
  // Predicated region
  $region18: #{_lambda_.6} parent=0 // pred_check
    %p224 = pneg %p14
  $region19: #{_lambda_.6} parent=0 // pred_check_branch
    %226 = sbr.rel (%p224) target = $region21
  $region20: #{_lambda_.6} parent=0 // pred_region
    %v227 = vld [vmem:[#allocation2] sm:$0xff]
    %v228 = vld [vmem:[#allocation2 + $0x8] sm:$0xff]
    %v229 = vld [vmem:[#allocation2 + $0x10] sm:$0xff]
    %v230 = vld [vmem:[#allocation2 + $0x18] sm:$0xff]
    %v231 = vld [vmem:[%s2] sm:$0x1]
    %v233 = vperm.slane %v231, 0
    %v235 = vadd.f32 %v227, %v233
    %v236 = vadd.f32 %v228, %v233
    %v237 = vadd.f32 %v229, %v233
    %v238 = vadd.f32 %v230, %v233
    %239 = vst [vmem:[%s3] sm:$0xff] %v235
    %240 = vst [vmem:[%s3 + $0x8] sm:$0xff] %v236
    %241 = vst [vmem:[%s3 + $0x10] sm:$0xff] %v237
    %242 = vst [vmem:[%s3 + $0x18] sm:$0xff] %v238
  $region21: #{_lambda_.6} parent=0 // pred_fallthru
    _
  // Predicated region
  $region22: #{_lambda_.6} parent=0 // pred_check
    _
  $region23: #{_lambda_.6} parent=0 // pred_check_branch
    %244 = sbr.rel (0) target = $region25
  $region24: #{_lambda_.6} parent=0 // pred_region
    _
  $region25: #{_lambda_.6} parent=0 // pred_fallthru
    _
  // Predicated region
  $region26: #{_lambda_.6} parent=0 // pred_check
    _
  $region27: #{_lambda_.6} parent=0 // pred_check_branch
    %246 = sbr.rel (0) target = $region29
  $region28: #{_lambda_.6} parent=0 // pred_region
    _
  $region29: #{_lambda_.6} parent=0 // pred_fallthru
    _

// kernel: _lambda_.8
$region0: #{_lambda_.8}
  #allocation0 [shape = 'u32[]', space=smem, size = 0x4, offset = 0x4, fixed_abs, tag = 'smem constant byte address 0x4 - core index']
  #allocation1 [shape = 'u32[72,128]{1,0:T(1,128)}', space=vmem, size = 0x9000, scoped, tag = 'internal scratch']
  %s0 = inlined_call_operand.vmem [shape: bf16[2,64,64], index: 0, kind: input, shape index: {}]
  %s1 = inlined_call_operand.vmem [shape: bf16[2,16,64], index: 1, kind: input, shape index: {}]
  %s2 = inlined_call_operand.vmem [shape: bf16[2,16,64], index: 2, kind: input, shape index: {}]
  %s3 = inlined_call_operand.vmem [shape: f32[2,64,64], index: 3, kind: output, shape index: {}]
  %s4 = sld [smem:[#allocation0]]
  $region45: #{_lambda_.8} parent=0
    _
  %s6 = ssub.s32 1, %s4
  %s7 = scalar_select 0, %s6, %s4
  loop: start=0, step=1, limit=4
  $region2: #{_lambda_.8} parent=0 // loop_pre_header
    _
  $region3: #{_lambda_.8} parent=0 // loop_header
    %s9 = sphi 0, %s13
    %p10 = scmp.ge.s32.totalorder %s9, 4
    %s19 = sphi 0, %s21
    %s22 = sphi 0, %s19
    %s23 = sphi 0, %s22
    %s39 = sphi 0, %s23
    %s45 = sphi 0, %s47
    %s48 = sphi 0, %s45
    %s49 = sphi 0, %s48
    %s65 = sphi 0, %s49
    %s71 = sphi 0, %s73
    %s74 = sphi 0, %s71
    %s75 = sphi 0, %s74
    %s91 = sphi 0, %s75
    %s97 = sphi 0, %s99
    %s100 = sphi 0, %s97
    %s101 = sphi 0, %s100
    %s117 = sphi 0, %s101
  $region4: #{_lambda_.8} parent=0 // loop_header_branch
    %12 = sbr.rel (%p10) target = $region8
  $region5: #{_lambda_.8} parent=0 // loop_body
    %s14 = ssub.s32 %s9, 1
    %s15 = ssub.s32 %s9, 2
    %s16 = sadd.s32 %s9, 1
    %s17 = ssub.s32 %s9, %s16
    %p18 = scmp.eq.s32.totalorder %s17, 0
    %s20 = sadd.s32 %s19, 1
    %s21 = scalar_select %p18, %s19, %s20
    %p24 = pneg %p18
    %p25 = scmp.eq.s32.totalorder %s9, 1
    %p26 = por %p24, %p25
    %p27 = scmp.ne.s32.totalorder %s19, %s22
    %p28 = scmp.eq.s32.totalorder %s9, 0
    %p29 = por %p27, %p28
    %p30 = scmp.ne.s32.totalorder %s19, %s22
    %p31 = scmp.eq.s32.totalorder %s14, 1
    %p32 = por %p30, %p31
    %p33 = scmp.ne.s32.totalorder %s22, %s23
    %p34 = scmp.eq.s32.totalorder %s14, 0
    %p35 = por %p33, %p34
    %p36 = scmp.ne.s32.totalorder %s22, %s23
    %p37 = scmp.eq.s32.totalorder %s15, 1
    %p38 = por %p36, %p37
    %p40 = scmp.ne.s32.totalorder %s23, %s39
    %p41 = scmp.eq.s32.totalorder %s15, 0
    %p42 = por %p40, %p41
    %s43 = ssub.s32 %s9, %s16
    %p44 = scmp.eq.s32.totalorder %s43, 0
    %s46 = sadd.s32 %s45, 1
    %s47 = scalar_select %p44, %s45, %s46
    %p50 = pneg %p44
    %p51 = scmp.eq.s32.totalorder %s9, 1
    %p52 = por %p50, %p51
    %p53 = scmp.ne.s32.totalorder %s45, %s48
    %p54 = scmp.eq.s32.totalorder %s9, 0
    %p55 = por %p53, %p54
    %p56 = scmp.ne.s32.totalorder %s45, %s48
    %p57 = scmp.eq.s32.totalorder %s14, 1
    %p58 = por %p56, %p57
    %p59 = scmp.ne.s32.totalorder %s48, %s49
    %p60 = scmp.eq.s32.totalorder %s14, 0
    %p61 = por %p59, %p60
    %p62 = scmp.ne.s32.totalorder %s48, %s49
    %p63 = scmp.eq.s32.totalorder %s15, 1
    %p64 = por %p62, %p63
    %p66 = scmp.ne.s32.totalorder %s49, %s65
    %p67 = scmp.eq.s32.totalorder %s15, 0
    %p68 = por %p66, %p67
    %s69 = ssub.s32 %s9, %s16
    %p70 = scmp.eq.s32.totalorder %s69, 0
    %s72 = sadd.s32 %s71, 1
    %s73 = scalar_select %p70, %s71, %s72
    %p76 = pneg %p70
    %p77 = scmp.eq.s32.totalorder %s9, 1
    %p78 = por %p76, %p77
    %p79 = scmp.ne.s32.totalorder %s71, %s74
    %p80 = scmp.eq.s32.totalorder %s9, 0
    %p81 = por %p79, %p80
    %p82 = scmp.ne.s32.totalorder %s71, %s74
    %p83 = scmp.eq.s32.totalorder %s14, 1
    %p84 = por %p82, %p83
    %p85 = scmp.ne.s32.totalorder %s74, %s75
    %p86 = scmp.eq.s32.totalorder %s14, 0
    %p87 = por %p85, %p86
    %p88 = scmp.ne.s32.totalorder %s74, %s75
    %p89 = scmp.eq.s32.totalorder %s15, 1
    %p90 = por %p88, %p89
    %p92 = scmp.ne.s32.totalorder %s75, %s91
    %p93 = scmp.eq.s32.totalorder %s15, 0
    %p94 = por %p92, %p93
    %s95 = ssub.s32 %s9, %s16
    %p96 = scmp.eq.s32.totalorder %s95, 0
    %s98 = sadd.s32 %s97, 1
    %s99 = scalar_select %p96, %s97, %s98
    %p102 = pneg %p96
    %p103 = scmp.eq.s32.totalorder %s9, 1
    %p104 = por %p102, %p103
    %p105 = scmp.ne.s32.totalorder %s97, %s100
    %p106 = scmp.eq.s32.totalorder %s9, 0
    %p107 = por %p105, %p106
    %p108 = scmp.ne.s32.totalorder %s97, %s100
    %p109 = scmp.eq.s32.totalorder %s14, 1
    %p110 = por %p108, %p109
    %p111 = scmp.ne.s32.totalorder %s100, %s101
    %p112 = scmp.eq.s32.totalorder %s14, 0
    %p113 = por %p111, %p112
    %p114 = scmp.ne.s32.totalorder %s100, %s101
    %p115 = scmp.eq.s32.totalorder %s15, 1
    %p116 = por %p114, %p115
    %p118 = scmp.ne.s32.totalorder %s101, %s117
    %p119 = scmp.eq.s32.totalorder %s15, 0
    %p120 = por %p118, %p119
    %p121 = scmp.le.s32.totalorder 1, %s9
    %p122 = scmp.lt.s32.totalorder %s9, 3
    %p123 = pnand %p121, %p122
    %p124 = pneg %p123
    // Predicated region
    $region9: #{_lambda_.8} parent=5 // pred_check
      _
    $region10: #{_lambda_.8} parent=5 // pred_check_branch
      %126 = sbr.rel (%p123) target = $region12
    $region11: #{_lambda_.8} parent=5 // pred_region
      %s127 = ssub.s32 %s9, 1
    $region12: #{_lambda_.8} parent=5 // pred_fallthru
      _
    %p128 = scmp.lt.s32.totalorder %s9, 2
    // Predicated region
    $region13: #{_lambda_.8} parent=5 // pred_check
      %p129 = pneg %p128
    $region14: #{_lambda_.8} parent=5 // pred_check_branch
      %131 = sbr.rel (%p129) target = $region16
    $region15: #{_lambda_.8} parent=5 // pred_region
      // Predicated region
      $region17: #{_lambda_.8} parent=15 // pred_check
        %p132 = pneg %p29
      $region18: #{_lambda_.8} parent=15 // pred_check_branch
        %134 = sbr.rel (%p132) target = $region20
      $region19: #{_lambda_.8} parent=15 // pred_region
        %p135 = scmp.lt.s32.totalorder %s9, 1
        %s136 = scalar_select %p135, %s9, 1
        %s137 = smul.addr %s136, 8
        %s138 = smul.addr %s137, 4
        %s139 = scalar_lea.vmem %s0, %s138
      $region20: #{_lambda_.8} parent=15 // pred_fallthru
        _
      // Predicated region
      $region21: #{_lambda_.8} parent=15 // pred_check
        %p140 = pneg %p55
      $region22: #{_lambda_.8} parent=15 // pred_check_branch
        %142 = sbr.rel (%p140) target = $region24
      $region23: #{_lambda_.8} parent=15 // pred_region
        %p143 = scmp.lt.s32.totalorder %s9, 1
        %s144 = scalar_select %p143, %s9, 1
        %s145 = smul.addr %s144, 2
        %s146 = smul.addr %s145, 4
        %s147 = scalar_lea.vmem %s1, %s146
      $region24: #{_lambda_.8} parent=15 // pred_fallthru
        _
      // Predicated region
      $region25: #{_lambda_.8} parent=15 // pred_check
        %p148 = pneg %p81
      $region26: #{_lambda_.8} parent=15 // pred_check_branch
        %150 = sbr.rel (%p148) target = $region28
      $region27: #{_lambda_.8} parent=15 // pred_region
        %p151 = scmp.lt.s32.totalorder %s9, 1
        %s152 = scalar_select %p151, %s9, 1
        %s153 = smul.addr %s152, 2
        %s154 = smul.addr %s153, 4
        %s155 = scalar_lea.vmem %s2, %s154
      $region28: #{_lambda_.8} parent=15 // pred_fallthru
        _
    $region16: #{_lambda_.8} parent=5 // pred_fallthru
      _
    %p156 = scmp.le.s32.totalorder 1, %s9
    %p157 = scmp.lt.s32.totalorder %s9, 3
    %p158 = pnand %p156, %p157
    %p159 = pneg %p158
    // Predicated region
    $region29: #{_lambda_.8} parent=5 // pred_check
      _
    $region30: #{_lambda_.8} parent=5 // pred_check_branch
      %161 = sbr.rel (%p158) target = $region32
    $region31: #{_lambda_.8} parent=5 // pred_region
      %s162 = ssub.s32 %s9, 1
      %p163 = scmp.lt.s32.totalorder %s14, 1
      %s164 = scalar_select %p163, %s14, 1
      %s165 = smul.addr %s164, 8
      %s166 = smul.addr %s165, 4
      %s167 = scalar_lea.vmem %s0, %s166
      %p168 = pneg %p35
      %p169 = pneg %p32
      %p170 = scmp.lt.s32.totalorder %s14, 1
      %s171 = scalar_select %p170, %s14, 1
      %s172 = smul.addr %s171, 2
      %s173 = smul.addr %s172, 4
      %s174 = scalar_lea.vmem %s1, %s173
      %p175 = pneg %p61
      %p176 = pneg %p58
      %p177 = scmp.lt.s32.totalorder %s14, 1
      %s178 = scalar_select %p177, %s14, 1
      %s179 = smul.addr %s178, 2
      %s180 = smul.addr %s179, 4
      %s181 = scalar_lea.vmem %s2, %s180
      %p182 = pneg %p87
      %p183 = pneg %p84
      %p184 = pneg %p113
      %p185 = pneg %p110
      %p186 = scmp.lt.s32.totalorder %s14, 1
      %s187 = scalar_select %p186, %s14, 1
      %s188 = smul.addr %s187, 8
      %s189 = smul.addr %s188, 8
      %s190 = scalar_lea.vmem %s3, %s189
      %p191 = scmp.lt.s32.totalorder %s14, 1
      %s192 = scalar_select %p191, %s14, 1
      %s193 = smul.addr %s192, 8
      %s194 = smul.addr %s193, 4
      %s195 = scalar_lea.vmem %s0, %s194
      %p196 = scmp.lt.s32.totalorder %s14, 1
      %s197 = scalar_select %p196, %s14, 1
      %s198 = smul.addr %s197, 2
      %s199 = smul.addr %s198, 4
      %s200 = scalar_lea.vmem %s1, %s199
      %p201 = scmp.lt.s32.totalorder %s14, 1
      %s202 = scalar_select %p201, %s14, 1
      %s203 = smul.addr %s202, 2
      %s204 = smul.addr %s203, 4
      %s205 = scalar_lea.vmem %s2, %s204
      %p206 = scmp.lt.s32.totalorder %s14, 1
      %s207 = scalar_select %p206, %s14, 1
      %s208 = smul.addr %s207, 8
      %s209 = smul.addr %s208, 8
      %s210 = scalar_lea.vmem %s3, %s209
      %v212 = vld [vmem:[%s195] sm:$0xf]
      %v213 = vld [vmem:[%s195 + $0x4] sm:$0xf]
      %v214 = vld [vmem:[%s195 + $0x8] sm:$0xf]
      %v215 = vld [vmem:[%s195 + $0xc] sm:$0xf]
      %v216 = vld [vmem:[%s195 + $0x10] sm:$0xf]
      %v217 = vld [vmem:[%s195 + $0x14] sm:$0xf]
      %v218 = vld [vmem:[%s195 + $0x18] sm:$0xf]
      %v219 = vld [vmem:[%s195 + $0x1c] sm:$0xf]
      %v220 = vld [vmem:[%s200] sm:$0xf]
      %v221 = vld [vmem:[%s200 + $0x4] sm:$0xf]
      %v222 = vld [vmem:[%s205] sm:$0xf]
      %v223 = vld [vmem:[%s205 + $0x4] sm:$0xf]
      %v232 = vunpack.c.l.b16 %v212
      %v233 = vunpack.c.l.b16 %v213
      %v234 = vunpack.c.l.b16 %v214
      %v235 = vunpack.c.l.b16 %v215
      %v236 = vunpack.c.l.b16 %v216
      %v237 = vunpack.c.l.b16 %v217
      %v238 = vunpack.c.l.b16 %v218
      %v239 = vunpack.c.l.b16 %v219
      %v240 = vpack.c.b16 %v233, %v232
      %v241 = vpack.c.b16 %v235, %v234
      %v242 = vpack.c.b16 %v237, %v236
      %v243 = vpack.c.b16 %v239, %v238
      %v246 = vunpack.c.l.b16 %v220
      %v247 = vunpack.c.l.b16 %v221
      %v248 = vpack.c.b16 %v247, %v246
      %vm249 = vcmask 261120
      %v251 = vsel %vm249, %v240, 0
      %v254 = vsel %vm249, %v241, 0
      %v257 = vsel %vm249, %v242, 0
      %v260 = vsel %vm249, %v243, 0
      %v263 = vsel %vm249, %v248, 0
      %265 = vmatpush.bf16.xpose.msra.mxu0 0
      %266 = vmatpush.bf16.xpose.msra.mxu0 0
      %267 = vmatpush.bf16.xpose.msra.mxu0 0
      %268 = vmatpush.bf16.xpose.msra.mxu0 0
      %269 = vmatpush.bf16.xpose.msra.mxu0 0
      %270 = vmatpush.bf16.xpose.msra.mxu0 0
      %271 = vmatpush.bf16.xpose.msra.mxu0 0
      %272 = vmatpush.bf16.xpose.msra.mxu0 %v263
      %273 = vmatmul.bf16.gmra.mxu0 %v251
      %v274 = vpop.f32.mrf.mxu0
      %v275 = vadd.f32 0.0, %v274
      %v276 = vpop.f32.mrf.mxu0
      %v277 = vadd.f32 0.0, %v276
      %278 = vmatmul.bf16.gmra.mxu0 %v254
      %v279 = vpop.f32.mrf.mxu0
      %v280 = vadd.f32 0.0, %v279
      %v281 = vpop.f32.mrf.mxu0
      %v282 = vadd.f32 0.0, %v281
      %283 = vmatmul.bf16.gmra.mxu0 %v257
      %v284 = vpop.f32.mrf.mxu0
      %v285 = vadd.f32 0.0, %v284
      %v286 = vpop.f32.mrf.mxu0
      %v287 = vadd.f32 0.0, %v286
      %288 = vmatmul.bf16.gmra.mxu0 %v260
      %v289 = vpop.f32.mrf.mxu0
      %v290 = vadd.f32 0.0, %v289
      %v291 = vpop.f32.mrf.mxu0
      %v292 = vadd.f32 0.0, %v291
      %293 = vdwg.mxu0
      %v294 = vmul.f32 %v275, 0.17677669
      %v295 = vmul.f32 %v277, 0.17677669
      %v296 = vmul.f32 %v280, 0.17677669
      %v297 = vmul.f32 %v282, 0.17677669
      %v298 = vmul.f32 %v285, 0.17677669
      %v299 = vmul.f32 %v287, 0.17677669
      %v300 = vmul.f32 %v290, 0.17677669
      %v301 = vmul.f32 %v292, 0.17677669
      %vm302 = vcmask 130048
      %v303 = vsel %vm302, %v294, -inf
      %304 = vmax.xlane.f32.xlu0 %v303
      %v305 = vpop.xlane.xlu0 %304
      %v306 = vsel %vm302, %v295, -inf
      %307 = vmax.xlane.f32.xlu0 %v306
      %v308 = vpop.xlane.xlu0 %307
      %v309 = vsel %vm302, %v296, -inf
      %310 = vmax.xlane.f32.xlu0 %v309
      %v311 = vpop.xlane.xlu0 %310
      %v312 = vsel %vm302, %v297, -inf
      %313 = vmax.xlane.f32.xlu0 %v312
      %v314 = vpop.xlane.xlu0 %313
      %v315 = vsel %vm302, %v298, -inf
      %316 = vmax.xlane.f32.xlu0 %v315
      %v317 = vpop.xlane.xlu0 %316
      %v318 = vsel %vm302, %v299, -inf
      %319 = vmax.xlane.f32.xlu0 %v318
      %v320 = vpop.xlane.xlu0 %319
      %v321 = vsel %vm302, %v300, -inf
      %322 = vmax.xlane.f32.xlu0 %v321
      %v323 = vpop.xlane.xlu0 %322
      %v324 = vsel %vm302, %v301, -inf
      %325 = vmax.xlane.f32.xlu0 %v324
      %v326 = vpop.xlane.xlu0 %325
      %v327 = vsub.f32 %v294, %v305
      %v328 = vsub.f32 %v295, %v308
      %v329 = vsub.f32 %v296, %v311
      %v330 = vsub.f32 %v297, %v314
      %v331 = vsub.f32 %v298, %v317
      %v332 = vsub.f32 %v299, %v320
      %v333 = vsub.f32 %v300, %v323
      %v334 = vsub.f32 %v301, %v326
      %v335 = vmul.f32 %v327, 1.442695
      %v336 = vpow.pop %v335
      %v337 = vmul.f32 %v328, 1.442695
      %v338 = vpow.pop %v337
      %v339 = vmul.f32 %v329, 1.442695
      %v340 = vpow.pop %v339
      %v341 = vmul.f32 %v330, 1.442695
      %v342 = vpow.pop %v341
      %v343 = vmul.f32 %v331, 1.442695
      %v344 = vpow.pop %v343
      %v345 = vmul.f32 %v332, 1.442695
      %v346 = vpow.pop %v345
      %v347 = vmul.f32 %v333, 1.442695
      %v348 = vpow.pop %v347
      %v349 = vmul.f32 %v334, 1.442695
      %v350 = vpow.pop %v349
      %v351 = vsel %vm302, %v336, 0.0
      %352 = vadd.xlane.f32.xlu0 %v351
      %v353 = vpop.xlane.xlu0 %352
      %v354 = vsel %vm302, %v338, 0.0
      %355 = vadd.xlane.f32.xlu0 %v354
      %v356 = vpop.xlane.xlu0 %355
      %v357 = vsel %vm302, %v340, 0.0
      %358 = vadd.xlane.f32.xlu0 %v357
      %v359 = vpop.xlane.xlu0 %358
      %v360 = vsel %vm302, %v342, 0.0
      %361 = vadd.xlane.f32.xlu0 %v360
      %v362 = vpop.xlane.xlu0 %361
      %v363 = vsel %vm302, %v344, 0.0
      %364 = vadd.xlane.f32.xlu0 %v363
      %v365 = vpop.xlane.xlu0 %364
      %v366 = vsel %vm302, %v346, 0.0
      %367 = vadd.xlane.f32.xlu0 %v366
      %v368 = vpop.xlane.xlu0 %367
      %v369 = vsel %vm302, %v348, 0.0
      %370 = vadd.xlane.f32.xlu0 %v369
      %v371 = vpop.xlane.xlu0 %370
      %v372 = vsel %vm302, %v350, 0.0
      %373 = vadd.xlane.f32.xlu0 %v372
      %v374 = vpop.xlane.xlu0 %373
      %v375 = vrcp.pop %v353
      %v376 = vrcp.pop %v356
      %v377 = vrcp.pop %v359
      %v378 = vrcp.pop %v362
      %v379 = vrcp.pop %v365
      %v380 = vrcp.pop %v368
      %v381 = vrcp.pop %v371
      %v382 = vrcp.pop %v374
      %v383 = vmul.f32 %v336, %v375
      %v384 = vmul.f32 %v338, %v376
      %v385 = vmul.f32 %v340, %v377
      %v386 = vmul.f32 %v342, %v378
      %v387 = vmul.f32 %v344, %v379
      %v388 = vmul.f32 %v346, %v380
      %v389 = vmul.f32 %v348, %v381
      %v390 = vmul.f32 %v350, %v382
      %v391 = vpack.c.bf16 %v384, %v383
      %v392 = vpack.c.bf16 %v386, %v385
      %v393 = vpack.c.bf16 %v388, %v387
      %v394 = vpack.c.bf16 %v390, %v389
      %v397 = vunpack.c.l.b16 %v222
      %v398 = vunpack.c.l.b16 %v223
      %v399 = vpack.c.b16 %v398, %v397
      %v402 = vsel %vm302, %v391, 0
      %v405 = vsel %vm302, %v392, 0
      %v408 = vsel %vm302, %v393, 0
      %v411 = vsel %vm302, %v394, 0
      %413 = vmatpush.bf16.msra.mxu0 0
      %414 = vmatpush.bf16.msra.mxu0 0
      %415 = vmatpush.bf16.msra.mxu0 0
      %416 = vmatpush.bf16.msra.mxu0 0
      %417 = vmatpush.bf16.msra.mxu0 0
      %418 = vmatpush.bf16.msra.mxu0 0
      %419 = vmatpush.bf16.msra.mxu0 0
      %420 = vmatpush.bf16.msra.mxu0 %v399
      %421 = vmatmul.bf16.gmra.mxu0 %v402
      %v422 = vpop.f32.mrf.mxu0
      %v423 = vadd.f32 0.0, %v422
      %v424 = vpop.f32.mrf.mxu0
      %v425 = vadd.f32 0.0, %v424
      %426 = vmatmul.bf16.gmra.mxu0 %v405
      %v427 = vpop.f32.mrf.mxu0
      %v428 = vadd.f32 0.0, %v427
      %v429 = vpop.f32.mrf.mxu0
      %v430 = vadd.f32 0.0, %v429
      %431 = vmatmul.bf16.gmra.mxu0 %v408
      %v432 = vpop.f32.mrf.mxu0
      %v433 = vadd.f32 0.0, %v432
      %v434 = vpop.f32.mrf.mxu0
      %v435 = vadd.f32 0.0, %v434
      %436 = vmatmul.bf16.gmra.mxu0 %v411
      %v437 = vpop.f32.mrf.mxu0
      %v438 = vadd.f32 0.0, %v437
      %v439 = vpop.f32.mrf.mxu0
      %v440 = vadd.f32 0.0, %v439
      %441 = vdwg.mxu0
      %442 = vrot.lane.b32.xlu0 %v240, 96
      %v443 = vpop.permute.xlu0 %442
      %444 = vrot.lane.b32.xlu0 %v241, 96
      %v445 = vpop.permute.xlu0 %444
      %446 = vrot.lane.b32.xlu0 %v242, 96
      %v447 = vpop.permute.xlu0 %446
      %448 = vrot.lane.b32.xlu0 %v243, 96
      %v449 = vpop.permute.xlu0 %448
      %450 = vrot.lane.b32.xlu0 %v248, 96
      %v451 = vpop.permute.xlu0 %450
      %v453 = vsel %vm249, %v443, 0
      %v456 = vsel %vm249, %v445, 0
      %v459 = vsel %vm249, %v447, 0
      %v462 = vsel %vm249, %v449, 0
      %v465 = vsel %vm249, %v451, 0
      %467 = vmatpush.bf16.xpose.msra.mxu0 0
      %468 = vmatpush.bf16.xpose.msra.mxu0 0
      %469 = vmatpush.bf16.xpose.msra.mxu0 0
      %470 = vmatpush.bf16.xpose.msra.mxu0 0
      %471 = vmatpush.bf16.xpose.msra.mxu0 0
      %472 = vmatpush.bf16.xpose.msra.mxu0 0
      %473 = vmatpush.bf16.xpose.msra.mxu0 0
      %474 = vmatpush.bf16.xpose.msra.mxu0 %v465
      %475 = vmatmul.bf16.gmra.mxu0 %v453
      %v476 = vpop.f32.mrf.mxu0
      %v477 = vadd.f32 0.0, %v476
      %v478 = vpop.f32.mrf.mxu0
      %v479 = vadd.f32 0.0, %v478
      %480 = vmatmul.bf16.gmra.mxu0 %v456
      %v481 = vpop.f32.mrf.mxu0
      %v482 = vadd.f32 0.0, %v481
      %v483 = vpop.f32.mrf.mxu0
      %v484 = vadd.f32 0.0, %v483
      %485 = vmatmul.bf16.gmra.mxu0 %v459
      %v486 = vpop.f32.mrf.mxu0
      %v487 = vadd.f32 0.0, %v486
      %v488 = vpop.f32.mrf.mxu0
      %v489 = vadd.f32 0.0, %v488
      %490 = vmatmul.bf16.gmra.mxu0 %v462
      %v491 = vpop.f32.mrf.mxu0
      %v492 = vadd.f32 0.0, %v491
      %v493 = vpop.f32.mrf.mxu0
      %v494 = vadd.f32 0.0, %v493
      %495 = vdwg.mxu0
      %v496 = vmul.f32 %v477, 0.17677669
      %v497 = vmul.f32 %v479, 0.17677669
      %v498 = vmul.f32 %v482, 0.17677669
      %v499 = vmul.f32 %v484, 0.17677669
      %v500 = vmul.f32 %v487, 0.17677669
      %v501 = vmul.f32 %v489, 0.17677669
      %v502 = vmul.f32 %v492, 0.17677669
      %v503 = vmul.f32 %v494, 0.17677669
      %v504 = vsel %vm302, %v496, -inf
      %505 = vmax.xlane.f32.xlu0 %v504
      %v506 = vpop.xlane.xlu0 %505
      %v507 = vsel %vm302, %v497, -inf
      %508 = vmax.xlane.f32.xlu0 %v507
      %v509 = vpop.xlane.xlu0 %508
      %v510 = vsel %vm302, %v498, -inf
      %511 = vmax.xlane.f32.xlu0 %v510
      %v512 = vpop.xlane.xlu0 %511
      %v513 = vsel %vm302, %v499, -inf
      %514 = vmax.xlane.f32.xlu0 %v513
      %v515 = vpop.xlane.xlu0 %514
      %v516 = vsel %vm302, %v500, -inf
      %517 = vmax.xlane.f32.xlu0 %v516
      %v518 = vpop.xlane.xlu0 %517
      %v519 = vsel %vm302, %v501, -inf
      %520 = vmax.xlane.f32.xlu0 %v519
      %v521 = vpop.xlane.xlu0 %520
      %v522 = vsel %vm302, %v502, -inf
      %523 = vmax.xlane.f32.xlu0 %v522
      %v524 = vpop.xlane.xlu0 %523
      %v525 = vsel %vm302, %v503, -inf
      %526 = vmax.xlane.f32.xlu0 %v525
      %v527 = vpop.xlane.xlu0 %526
      %v528 = vsub.f32 %v496, %v506
      %v529 = vsub.f32 %v497, %v509
      %v530 = vsub.f32 %v498, %v512
      %v531 = vsub.f32 %v499, %v515
      %v532 = vsub.f32 %v500, %v518
      %v533 = vsub.f32 %v501, %v521
      %v534 = vsub.f32 %v502, %v524
      %v535 = vsub.f32 %v503, %v527
      %v536 = vmul.f32 %v528, 1.442695
      %v537 = vpow.pop %v536
      %v538 = vmul.f32 %v529, 1.442695
      %v539 = vpow.pop %v538
      %v540 = vmul.f32 %v530, 1.442695
      %v541 = vpow.pop %v540
      %v542 = vmul.f32 %v531, 1.442695
      %v543 = vpow.pop %v542
      %v544 = vmul.f32 %v532, 1.442695
      %v545 = vpow.pop %v544
      %v546 = vmul.f32 %v533, 1.442695
      %v547 = vpow.pop %v546
      %v548 = vmul.f32 %v534, 1.442695
      %v549 = vpow.pop %v548
      %v550 = vmul.f32 %v535, 1.442695
      %v551 = vpow.pop %v550
      %v552 = vsel %vm302, %v537, 0.0
      %553 = vadd.xlane.f32.xlu0 %v552
      %v554 = vpop.xlane.xlu0 %553
      %v555 = vsel %vm302, %v539, 0.0
      %556 = vadd.xlane.f32.xlu0 %v555
      %v557 = vpop.xlane.xlu0 %556
      %v558 = vsel %vm302, %v541, 0.0
      %559 = vadd.xlane.f32.xlu0 %v558
      %v560 = vpop.xlane.xlu0 %559
      %v561 = vsel %vm302, %v543, 0.0
      %562 = vadd.xlane.f32.xlu0 %v561
      %v563 = vpop.xlane.xlu0 %562
      %v564 = vsel %vm302, %v545, 0.0
      %565 = vadd.xlane.f32.xlu0 %v564
      %v566 = vpop.xlane.xlu0 %565
      %v567 = vsel %vm302, %v547, 0.0
      %568 = vadd.xlane.f32.xlu0 %v567
      %v569 = vpop.xlane.xlu0 %568
      %v570 = vsel %vm302, %v549, 0.0
      %571 = vadd.xlane.f32.xlu0 %v570
      %v572 = vpop.xlane.xlu0 %571
      %v573 = vsel %vm302, %v551, 0.0
      %574 = vadd.xlane.f32.xlu0 %v573
      %v575 = vpop.xlane.xlu0 %574
      %v576 = vrcp.pop %v554
      %v577 = vrcp.pop %v557
      %v578 = vrcp.pop %v560
      %v579 = vrcp.pop %v563
      %v580 = vrcp.pop %v566
      %v581 = vrcp.pop %v569
      %v582 = vrcp.pop %v572
      %v583 = vrcp.pop %v575
      %v584 = vmul.f32 %v537, %v576
      %v585 = vmul.f32 %v539, %v577
      %v586 = vmul.f32 %v541, %v578
      %v587 = vmul.f32 %v543, %v579
      %v588 = vmul.f32 %v545, %v580
      %v589 = vmul.f32 %v547, %v581
      %v590 = vmul.f32 %v549, %v582
      %v591 = vmul.f32 %v551, %v583
      %v592 = vpack.c.bf16 %v585, %v584
      %v593 = vpack.c.bf16 %v587, %v586
      %v594 = vpack.c.bf16 %v589, %v588
      %v595 = vpack.c.bf16 %v591, %v590
      %596 = vrot.lane.b32.xlu0 %v399, 96
      %v597 = vpop.permute.xlu0 %596
      %v600 = vsel %vm302, %v592, 0
      %v603 = vsel %vm302, %v593, 0
      %v606 = vsel %vm302, %v594, 0
      %v609 = vsel %vm302, %v595, 0
      %611 = vmatpush.bf16.msra.mxu0 0
      %612 = vmatpush.bf16.msra.mxu0 0
      %613 = vmatpush.bf16.msra.mxu0 0
      %614 = vmatpush.bf16.msra.mxu0 0
      %615 = vmatpush.bf16.msra.mxu0 0
      %616 = vmatpush.bf16.msra.mxu0 0
      %617 = vmatpush.bf16.msra.mxu0 0
      %618 = vmatpush.bf16.msra.mxu0 %v597
      %619 = vmatmul.bf16.gmra.mxu0 %v600
      %v620 = vpop.f32.mrf.mxu0
      %v621 = vadd.f32 0.0, %v620
      %v622 = vpop.f32.mrf.mxu0
      %v623 = vadd.f32 0.0, %v622
      %624 = vmatmul.bf16.gmra.mxu0 %v603
      %v625 = vpop.f32.mrf.mxu0
      %v626 = vadd.f32 0.0, %v625
      %v627 = vpop.f32.mrf.mxu0
      %v628 = vadd.f32 0.0, %v627
      %629 = vmatmul.bf16.gmra.mxu0 %v606
      %v630 = vpop.f32.mrf.mxu0
      %v631 = vadd.f32 0.0, %v630
      %v632 = vpop.f32.mrf.mxu0
      %v633 = vadd.f32 0.0, %v632
      %634 = vmatmul.bf16.gmra.mxu0 %v609
      %v635 = vpop.f32.mrf.mxu0
      %v636 = vadd.f32 0.0, %v635
      %v637 = vpop.f32.mrf.mxu0
      %v638 = vadd.f32 0.0, %v637
      %639 = vdwg.mxu0
      %648 = vrot.lane.b32.xlu0 %v621, 32
      %v649 = vpop.permute.xlu0 %648
      %650 = vrot.lane.b32.xlu0 %v623, 32
      %v651 = vpop.permute.xlu0 %650
      %652 = vrot.lane.b32.xlu0 %v626, 32
      %v653 = vpop.permute.xlu0 %652
      %654 = vrot.lane.b32.xlu0 %v628, 32
      %v655 = vpop.permute.xlu0 %654
      %656 = vrot.lane.b32.xlu0 %v631, 32
      %v657 = vpop.permute.xlu0 %656
      %658 = vrot.lane.b32.xlu0 %v633, 32
      %v659 = vpop.permute.xlu0 %658
      %660 = vrot.lane.b32.xlu0 %v636, 32
      %v661 = vpop.permute.xlu0 %660
      %662 = vrot.lane.b32.xlu0 %v638, 32
      %v663 = vpop.permute.xlu0 %662
      %v672 = vsel %vm249, %v423, %v649
      %v673 = vsel %vm249, %v425, %v651
      %v674 = vsel %vm249, %v428, %v653
      %v675 = vsel %vm249, %v430, %v655
      %v676 = vsel %vm249, %v433, %v657
      %v677 = vsel %vm249, %v435, %v659
      %v678 = vsel %vm249, %v438, %v661
      %v679 = vsel %vm249, %v440, %v663
      %vm680 = vcmask 523264
      %681 = vst.msk [vmem:[%s210] sm:$0xff] %vm680, %v672
      %682 = vst.msk [vmem:[%s210 + $0x8] sm:$0xff] %vm680, %v673
      %683 = vst.msk [vmem:[%s210 + $0x10] sm:$0xff] %vm680, %v674
      %684 = vst.msk [vmem:[%s210 + $0x18] sm:$0xff] %vm680, %v675
      %685 = vst.msk [vmem:[%s210 + $0x20] sm:$0xff] %vm680, %v676
      %686 = vst.msk [vmem:[%s210 + $0x28] sm:$0xff] %vm680, %v677
      %687 = vst.msk [vmem:[%s210 + $0x30] sm:$0xff] %vm680, %v678
      %688 = vst.msk [vmem:[%s210 + $0x38] sm:$0xff] %vm680, %v679
      %p689 = scmp.lt.s32.totalorder %s14, 1
      %s690 = scalar_select %p689, %s14, 1
      %s691 = smul.addr %s690, 8
      %s692 = smul.addr %s691, 8
      %s693 = scalar_lea.vmem %s3, %s692
      // Predicated region
      $region33: #{_lambda_.8} parent=31 // pred_check
        %p694 = pneg %p110
      $region34: #{_lambda_.8} parent=31 // pred_check_branch
        %696 = sbr.rel (%p694) target = $region36
      $region35: #{_lambda_.8} parent=31 // pred_region
        _
      $region36: #{_lambda_.8} parent=31 // pred_fallthru
        _
    $region32: #{_lambda_.8} parent=5 // pred_fallthru
      _
    %p697 = scmp.le.s32.totalorder 2, %s9
    // Predicated region
    $region37: #{_lambda_.8} parent=5 // pred_check
      %p698 = pneg %p697
    $region38: #{_lambda_.8} parent=5 // pred_check_branch
      %700 = sbr.rel (%p698) target = $region40
    $region39: #{_lambda_.8} parent=5 // pred_region
      %s701 = ssub.s32 %s9, 2
      // Predicated region
      $region41: #{_lambda_.8} parent=39 // pred_check
        %p702 = pneg %p116
      $region42: #{_lambda_.8} parent=39 // pred_check_branch
        %704 = sbr.rel (%p702) target = $region44
      $region43: #{_lambda_.8} parent=39 // pred_region
        %p705 = scmp.lt.s32.totalorder %s15, 1
        %s706 = scalar_select %p705, %s15, 1
        %s707 = smul.addr %s706, 8
        %s708 = smul.addr %s707, 8
        %s709 = scalar_lea.vmem %s3, %s708
      $region44: #{_lambda_.8} parent=39 // pred_fallthru
        _
    $region40: #{_lambda_.8} parent=5 // pred_fallthru
      _
  $region6: #{_lambda_.8} parent=0 // loop_footer
    %s13 = sadd.s32 1, %s9
  $region7: #{_lambda_.8} parent=0 // loop_footer_branch
    %8 = sbr.rel target = $region3
  $region8: #{_lambda_.8} parent=0 // loop_exit
    _

// kernel: _lambda_.9
$region0: #{_lambda_.9}
  #allocation0 [shape = 'u32[]', space=smem, size = 0x4, offset = 0x4, fixed_abs, tag = 'smem constant byte address 0x4 - core index']
  #allocation1 [shape = 'u32[72,128]{1,0:T(1,128)}', space=vmem, size = 0x9000, scoped, tag = 'internal scratch']
  #allocation2 [shape = 'f32[128,128]{1,0:T(8,128)}', space=vmem, size = 0x10000, scoped, tag = 'scratch operand']
  %s0 = inlined_call_operand.vmem [shape: bf16[128,128], index: 0, kind: input, shape index: {}]
  %s1 = inlined_call_operand.vmem [shape: bf16[128,128], index: 1, kind: input, shape index: {}]
  %s2 = inlined_call_operand.vmem [shape: f32[1,128], index: 2, kind: input, shape index: {}]
  %s3 = inlined_call_operand.hbm [shape: f32[128,128], index: 3, kind: output, shape index: {}]
  %s4 = sld [smem:[#allocation0]]
  $region30: #{_lambda_.9} parent=0
    _
  %s6 = ssub.s32 1, %s4
  %s7 = scalar_select 0, %s6, %s4
  $region1: #{_lambda_.9} parent=0
    #allocation3 [shape = 'u8[65536]{0}', space=vmem, size = 0x10000, scoped, tag = 'output window, operand 0, single buffered']
    #allocation4 [shape = 's32[1]{0}', space=sflag, size = 0x4, scoped, tag = 'scoped memory for _lambda_.9']
    %8 = vsyncpa [#allocation4], 0
    // Predicated region
    $region2: #{_lambda_.9} parent=1 // pred_check
      _
    $region3: #{_lambda_.9} parent=1 // pred_check_branch
      %10 = sbr.rel (0) target = $region5
    $region4: #{_lambda_.9} parent=1 // pred_region
      _
    $region5: #{_lambda_.9} parent=1 // pred_fallthru
      _
    // Predicated region
    $region6: #{_lambda_.9} parent=1 // pred_check
      _
    $region7: #{_lambda_.9} parent=1 // pred_check_branch
      %12 = sbr.rel (0) target = $region9
    $region8: #{_lambda_.9} parent=1 // pred_region
      _
    $region9: #{_lambda_.9} parent=1 // pred_fallthru
      _
    // Predicated region
    $region10: #{_lambda_.9} parent=1 // pred_check
      _
    $region11: #{_lambda_.9} parent=1 // pred_check_branch
      %14 = sbr.rel (0) target = $region13
    $region12: #{_lambda_.9} parent=1 // pred_region
      _
    $region13: #{_lambda_.9} parent=1 // pred_fallthru
      _
    %p15 = scmp.eq.s32.totalorder 0, 0
    // Predicated region
    $region14: #{_lambda_.9} parent=1 // pred_check
      %p16 = pneg %p15
    $region15: #{_lambda_.9} parent=1 // pred_check_branch
      %18 = sbr.rel (%p16) target = $region17
    $region16: #{_lambda_.9} parent=1 // pred_region
      %19 = vst [vmem:[#allocation2] sm:$0xff] 0.0
      %20 = vst [vmem:[#allocation2 + $0x8] sm:$0xff] 0.0
      %21 = vst [vmem:[#allocation2 + $0x10] sm:$0xff] 0.0
      %22 = vst [vmem:[#allocation2 + $0x18] sm:$0xff] 0.0
      %23 = vst [vmem:[#allocation2 + $0x20] sm:$0xff] 0.0
      %24 = vst [vmem:[#allocation2 + $0x28] sm:$0xff] 0.0
      %25 = vst [vmem:[#allocation2 + $0x30] sm:$0xff] 0.0
      %26 = vst [vmem:[#allocation2 + $0x38] sm:$0xff] 0.0
      %27 = vst [vmem:[#allocation2 + $0x40] sm:$0xff] 0.0
      %28 = vst [vmem:[#allocation2 + $0x48] sm:$0xff] 0.0
      %29 = vst [vmem:[#allocation2 + $0x50] sm:$0xff] 0.0
      %30 = vst [vmem:[#allocation2 + $0x58] sm:$0xff] 0.0
      %31 = vst [vmem:[#allocation2 + $0x60] sm:$0xff] 0.0
      %32 = vst [vmem:[#allocation2 + $0x68] sm:$0xff] 0.0
      %33 = vst [vmem:[#allocation2 + $0x70] sm:$0xff] 0.0
      %34 = vst [vmem:[#allocation2 + $0x78] sm:$0xff] 0.0
    $region17: #{_lambda_.9} parent=1 // pred_fallthru
      _
    %v35 = vld [vmem:[#allocation2] sm:$0xff]
    %v36 = vld [vmem:[#allocation2 + $0x8] sm:$0xff]
    %v37 = vld [vmem:[#allocation2 + $0x10] sm:$0xff]
    %v38 = vld [vmem:[#allocation2 + $0x18] sm:$0xff]
    %v39 = vld [vmem:[#allocation2 + $0x20] sm:$0xff]
    %v40 = vld [vmem:[#allocation2 + $0x28] sm:$0xff]
    %v41 = vld [vmem:[#allocation2 + $0x30] sm:$0xff]
    %v42 = vld [vmem:[#allocation2 + $0x38] sm:$0xff]
    %v43 = vld [vmem:[#allocation2 + $0x40] sm:$0xff]
    %v44 = vld [vmem:[#allocation2 + $0x48] sm:$0xff]
    %v45 = vld [vmem:[#allocation2 + $0x50] sm:$0xff]
    %v46 = vld [vmem:[#allocation2 + $0x58] sm:$0xff]
    %v47 = vld [vmem:[#allocation2 + $0x60] sm:$0xff]
    %v48 = vld [vmem:[#allocation2 + $0x68] sm:$0xff]
    %v49 = vld [vmem:[#allocation2 + $0x70] sm:$0xff]
    %v50 = vld [vmem:[#allocation2 + $0x78] sm:$0xff]
    %v51 = vld [vmem:[%s0] sm:$0xf]
    %v52 = vld [vmem:[%s0 + $0x4] sm:$0xf]
    %v53 = vld [vmem:[%s0 + $0x8] sm:$0xf]
    %v54 = vld [vmem:[%s0 + $0xc] sm:$0xf]
    %v55 = vld [vmem:[%s0 + $0x10] sm:$0xf]
    %v56 = vld [vmem:[%s0 + $0x14] sm:$0xf]
    %v57 = vld [vmem:[%s0 + $0x18] sm:$0xf]
    %v58 = vld [vmem:[%s0 + $0x1c] sm:$0xf]
    %v59 = vld [vmem:[%s0 + $0x20] sm:$0xf]
    %v60 = vld [vmem:[%s0 + $0x24] sm:$0xf]
    %v61 = vld [vmem:[%s0 + $0x28] sm:$0xf]
    %v62 = vld [vmem:[%s0 + $0x2c] sm:$0xf]
    %v63 = vld [vmem:[%s0 + $0x30] sm:$0xf]
    %v64 = vld [vmem:[%s0 + $0x34] sm:$0xf]
    %v65 = vld [vmem:[%s0 + $0x38] sm:$0xf]
    %v66 = vld [vmem:[%s0 + $0x3c] sm:$0xf]
    %v67 = vld [vmem:[%s1] sm:$0xf]
    %v68 = vld [vmem:[%s1 + $0x4] sm:$0xf]
    %v69 = vld [vmem:[%s1 + $0x8] sm:$0xf]
    %v70 = vld [vmem:[%s1 + $0xc] sm:$0xf]
    %v71 = vld [vmem:[%s1 + $0x10] sm:$0xf]
    %v72 = vld [vmem:[%s1 + $0x14] sm:$0xf]
    %v73 = vld [vmem:[%s1 + $0x18] sm:$0xf]
    %v74 = vld [vmem:[%s1 + $0x1c] sm:$0xf]
    %v75 = vld [vmem:[%s1 + $0x20] sm:$0xf]
    %v76 = vld [vmem:[%s1 + $0x24] sm:$0xf]
    %v77 = vld [vmem:[%s1 + $0x28] sm:$0xf]
    %v78 = vld [vmem:[%s1 + $0x2c] sm:$0xf]
    %v79 = vld [vmem:[%s1 + $0x30] sm:$0xf]
    %v80 = vld [vmem:[%s1 + $0x34] sm:$0xf]
    %v81 = vld [vmem:[%s1 + $0x38] sm:$0xf]
    %v82 = vld [vmem:[%s1 + $0x3c] sm:$0xf]
    %v99 = vunpack.c.l.b16 %v51
    %v100 = vunpack.c.l.b16 %v52
    %v101 = vunpack.c.l.b16 %v53
    %v102 = vunpack.c.l.b16 %v54
    %v103 = vunpack.c.l.b16 %v55
    %v104 = vunpack.c.l.b16 %v56
    %v105 = vunpack.c.l.b16 %v57
    %v106 = vunpack.c.l.b16 %v58
    %v107 = vunpack.c.l.b16 %v59
    %v108 = vunpack.c.l.b16 %v60
    %v109 = vunpack.c.l.b16 %v61
    %v110 = vunpack.c.l.b16 %v62
    %v111 = vunpack.c.l.b16 %v63
    %v112 = vunpack.c.l.b16 %v64
    %v113 = vunpack.c.l.b16 %v65
    %v114 = vunpack.c.l.b16 %v66
    %v115 = vpack.c.b16 %v100, %v99
    %v116 = vpack.c.b16 %v102, %v101
    %v117 = vpack.c.b16 %v104, %v103
    %v118 = vpack.c.b16 %v106, %v105
    %v119 = vpack.c.b16 %v108, %v107
    %v120 = vpack.c.b16 %v110, %v109
    %v121 = vpack.c.b16 %v112, %v111
    %v122 = vpack.c.b16 %v114, %v113
    %v147 = vunpack.c.l.b16 %v67
    %v148 = vunpack.c.l.b16 %v68
    %v149 = vunpack.c.l.b16 %v69
    %v150 = vunpack.c.l.b16 %v70
    %v151 = vunpack.c.l.b16 %v71
    %v152 = vunpack.c.l.b16 %v72
    %v153 = vunpack.c.l.b16 %v73
    %v154 = vunpack.c.l.b16 %v74
    %v155 = vunpack.c.l.b16 %v75
    %v156 = vunpack.c.l.b16 %v76
    %v157 = vunpack.c.l.b16 %v77
    %v158 = vunpack.c.l.b16 %v78
    %v159 = vunpack.c.l.b16 %v79
    %v160 = vunpack.c.l.b16 %v80
    %v161 = vunpack.c.l.b16 %v81
    %v162 = vunpack.c.l.b16 %v82
    %v163 = vpack.c.b16 %v148, %v147
    %v164 = vpack.c.b16 %v150, %v149
    %v165 = vpack.c.b16 %v152, %v151
    %v166 = vpack.c.b16 %v154, %v153
    %v167 = vpack.c.b16 %v156, %v155
    %v168 = vpack.c.b16 %v158, %v157
    %v169 = vpack.c.b16 %v160, %v159
    %v170 = vpack.c.b16 %v162, %v161
    %179 = vmatpush.bf16.msra.mxu0 %v170
    %180 = vmatpush.bf16.msra.mxu0 %v169
    %181 = vmatpush.bf16.msra.mxu0 %v168
    %182 = vmatpush.bf16.msra.mxu0 %v167
    %183 = vmatpush.bf16.msra.mxu0 %v166
    %184 = vmatpush.bf16.msra.mxu0 %v165
    %185 = vmatpush.bf16.msra.mxu0 %v164
    %186 = vmatpush.bf16.msra.mxu0 %v163
    %187 = vmatmul.bf16.gmra.mxu0 %v115
    %v188 = vpop.f32.mrf.mxu0
    %v189 = vadd.f32 0.0, %v188
    %v190 = vpop.f32.mrf.mxu0
    %v191 = vadd.f32 0.0, %v190
    %192 = vmatmul.bf16.gmra.mxu0 %v116
    %v193 = vpop.f32.mrf.mxu0
    %v194 = vadd.f32 0.0, %v193
    %v195 = vpop.f32.mrf.mxu0
    %v196 = vadd.f32 0.0, %v195
    %197 = vmatmul.bf16.gmra.mxu0 %v117
    %v198 = vpop.f32.mrf.mxu0
    %v199 = vadd.f32 0.0, %v198
    %v200 = vpop.f32.mrf.mxu0
    %v201 = vadd.f32 0.0, %v200
    %202 = vmatmul.bf16.gmra.mxu0 %v118
    %v203 = vpop.f32.mrf.mxu0
    %v204 = vadd.f32 0.0, %v203
    %v205 = vpop.f32.mrf.mxu0
    %v206 = vadd.f32 0.0, %v205
    %207 = vmatmul.bf16.gmra.mxu0 %v119
    %v208 = vpop.f32.mrf.mxu0
    %v209 = vadd.f32 0.0, %v208
    %v210 = vpop.f32.mrf.mxu0
    %v211 = vadd.f32 0.0, %v210
    %212 = vmatmul.bf16.gmra.mxu0 %v120
    %v213 = vpop.f32.mrf.mxu0
    %v214 = vadd.f32 0.0, %v213
    %v215 = vpop.f32.mrf.mxu0
    %v216 = vadd.f32 0.0, %v215
    %217 = vmatmul.bf16.gmra.mxu0 %v121
    %v218 = vpop.f32.mrf.mxu0
    %v219 = vadd.f32 0.0, %v218
    %v220 = vpop.f32.mrf.mxu0
    %v221 = vadd.f32 0.0, %v220
    %222 = vmatmul.bf16.gmra.mxu0 %v122
    %v223 = vpop.f32.mrf.mxu0
    %v224 = vadd.f32 0.0, %v223
    %v225 = vpop.f32.mrf.mxu0
    %v226 = vadd.f32 0.0, %v225
    %227 = vdwg.mxu0
    %v228 = vadd.f32 %v35, %v189
    %v229 = vadd.f32 %v36, %v191
    %v230 = vadd.f32 %v37, %v194
    %v231 = vadd.f32 %v38, %v196
    %v232 = vadd.f32 %v39, %v199
    %v233 = vadd.f32 %v40, %v201
    %v234 = vadd.f32 %v41, %v204
    %v235 = vadd.f32 %v42, %v206
    %v236 = vadd.f32 %v43, %v209
    %v237 = vadd.f32 %v44, %v211
    %v238 = vadd.f32 %v45, %v214
    %v239 = vadd.f32 %v46, %v216
    %v240 = vadd.f32 %v47, %v219
    %v241 = vadd.f32 %v48, %v221
    %v242 = vadd.f32 %v49, %v224
    %v243 = vadd.f32 %v50, %v226
    %244 = vst [vmem:[#allocation2] sm:$0xff] %v228
    %245 = vst [vmem:[#allocation2 + $0x8] sm:$0xff] %v229
    %246 = vst [vmem:[#allocation2 + $0x10] sm:$0xff] %v230
    %247 = vst [vmem:[#allocation2 + $0x18] sm:$0xff] %v231
    %248 = vst [vmem:[#allocation2 + $0x20] sm:$0xff] %v232
    %249 = vst [vmem:[#allocation2 + $0x28] sm:$0xff] %v233
    %250 = vst [vmem:[#allocation2 + $0x30] sm:$0xff] %v234
    %251 = vst [vmem:[#allocation2 + $0x38] sm:$0xff] %v235
    %252 = vst [vmem:[#allocation2 + $0x40] sm:$0xff] %v236
    %253 = vst [vmem:[#allocation2 + $0x48] sm:$0xff] %v237
    %254 = vst [vmem:[#allocation2 + $0x50] sm:$0xff] %v238
    %255 = vst [vmem:[#allocation2 + $0x58] sm:$0xff] %v239
    %256 = vst [vmem:[#allocation2 + $0x60] sm:$0xff] %v240
    %257 = vst [vmem:[#allocation2 + $0x68] sm:$0xff] %v241
    %258 = vst [vmem:[#allocation2 + $0x70] sm:$0xff] %v242
    %259 = vst [vmem:[#allocation2 + $0x78] sm:$0xff] %v243
    // Predicated region
    $region18: #{_lambda_.9} parent=1 // pred_check
      %p260 = pneg %p15
    $region19: #{_lambda_.9} parent=1 // pred_check_branch
      %262 = sbr.rel (%p260) target = $region21
    $region20: #{_lambda_.9} parent=1 // pred_region
      %v263 = vld [vmem:[#allocation2] sm:$0xff]
      %v264 = vld [vmem:[#allocation2 + $0x8] sm:$0xff]
      %v265 = vld [vmem:[#allocation2 + $0x10] sm:$0xff]
      %v266 = vld [vmem:[#allocation2 + $0x18] sm:$0xff]
      %v267 = vld [vmem:[#allocation2 + $0x20] sm:$0xff]
      %v268 = vld [vmem:[#allocation2 + $0x28] sm:$0xff]
      %v269 = vld [vmem:[#allocation2 + $0x30] sm:$0xff]
      %v270 = vld [vmem:[#allocation2 + $0x38] sm:$0xff]
      %v271 = vld [vmem:[#allocation2 + $0x40] sm:$0xff]
      %v272 = vld [vmem:[#allocation2 + $0x48] sm:$0xff]
      %v273 = vld [vmem:[#allocation2 + $0x50] sm:$0xff]
      %v274 = vld [vmem:[#allocation2 + $0x58] sm:$0xff]
      %v275 = vld [vmem:[#allocation2 + $0x60] sm:$0xff]
      %v276 = vld [vmem:[#allocation2 + $0x68] sm:$0xff]
      %v277 = vld [vmem:[#allocation2 + $0x70] sm:$0xff]
      %v278 = vld [vmem:[#allocation2 + $0x78] sm:$0xff]
      %v279 = vld [vmem:[%s2] sm:$0x1]
      %v281 = vperm.slane %v279, 0
      %v283 = vadd.f32 %v263, %v281
      %v284 = vadd.f32 %v264, %v281
      %v285 = vadd.f32 %v265, %v281
      %v286 = vadd.f32 %v266, %v281
      %v287 = vadd.f32 %v267, %v281
      %v288 = vadd.f32 %v268, %v281
      %v289 = vadd.f32 %v269, %v281
      %v290 = vadd.f32 %v270, %v281
      %v291 = vadd.f32 %v271, %v281
      %v292 = vadd.f32 %v272, %v281
      %v293 = vadd.f32 %v273, %v281
      %v294 = vadd.f32 %v274, %v281
      %v295 = vadd.f32 %v275, %v281
      %v296 = vadd.f32 %v276, %v281
      %v297 = vadd.f32 %v277, %v281
      %v298 = vadd.f32 %v278, %v281
      %299 = vst [vmem:[#allocation3] sm:$0xff] %v283
      %300 = vst [vmem:[#allocation3 + $0x8] sm:$0xff] %v284
      %301 = vst [vmem:[#allocation3 + $0x10] sm:$0xff] %v285
      %302 = vst [vmem:[#allocation3 + $0x18] sm:$0xff] %v286
      %303 = vst [vmem:[#allocation3 + $0x20] sm:$0xff] %v287
      %304 = vst [vmem:[#allocation3 + $0x28] sm:$0xff] %v288
      %305 = vst [vmem:[#allocation3 + $0x30] sm:$0xff] %v289
      %306 = vst [vmem:[#allocation3 + $0x38] sm:$0xff] %v290
      %307 = vst [vmem:[#allocation3 + $0x40] sm:$0xff] %v291
      %308 = vst [vmem:[#allocation3 + $0x48] sm:$0xff] %v292
      %309 = vst [vmem:[#allocation3 + $0x50] sm:$0xff] %v293
      %310 = vst [vmem:[#allocation3 + $0x58] sm:$0xff] %v294
      %311 = vst [vmem:[#allocation3 + $0x60] sm:$0xff] %v295
      %312 = vst [vmem:[#allocation3 + $0x68] sm:$0xff] %v296
      %313 = vst [vmem:[#allocation3 + $0x70] sm:$0xff] %v297
      %314 = vst [vmem:[#allocation3 + $0x78] sm:$0xff] %v298
    $region21: #{_lambda_.9} parent=1 // pred_fallthru
      _
    // Predicated region
    $region22: #{_lambda_.9} parent=1 // pred_check
      _
    $region23: #{_lambda_.9} parent=1 // pred_check_branch
      %316 = sbr.rel (0) target = $region25
    $region24: #{_lambda_.9} parent=1 // pred_region
      %318 = vsyncadd [#allocation4], 0
      %s319 = sshll.u32 [#allocation3], 4
      %s320 = int_to_ptr.vmem [resolvable:$true] %s319
      %s321 = sshll.u32 %s3, 4
      %s322 = int_to_ptr.hbm [resolvable:$true] %s321
      %327 = dma.vmem_to_hbm [thread:$0]  %s320, 2048, %s322, [#allocation4], 128, 128, 8
    $region25: #{_lambda_.9} parent=1 // pred_fallthru
      _
    // Predicated region
    $region26: #{_lambda_.9} parent=1 // pred_check
      _
    $region27: #{_lambda_.9} parent=1 // pred_check_branch
      %329 = sbr.rel (0) target = $region29
    $region28: #{_lambda_.9} parent=1 // pred_region
      %331 = dma.done [#allocation4], 2048
    $region29: #{_lambda_.9} parent=1 // pred_fallthru
      _
    %332 = vsyncpa [#allocation4], 1

</llo_original>
